<compile_context>
chip_gen: v7x
topology: tpu7x:2x2x1
jax: 0.10.0
libtpu: 0.0.40
codegen_flags: <defaults>
</compile_context>

<pallas_src>
import functools

import numpy as np
import jax
import jax.numpy as jnp
from jax import lax
from jax.experimental import pallas as pl
from jax.experimental.pallas import tpu as pltpu

EPS = 1e-5  # nn.LayerNorm default eps


def _round_up(x, m):
    return (x + m - 1) // m * m


def _nbytes(shape, dtype):
    return int(np.prod(shape)) * jnp.dtype(dtype).itemsize


def _vmem_limit(block_bytes, cap=48 * 1024 * 1024):
    """Double-buffer every block (conservative) + headroom, capped below v7x's
    64 MiB physical VMEM so the big-block strategy stays viable per-TC."""
    need = 2 * int(block_bytes) + (8 << 20)
    return int(min(max(need, 16 << 20), cap))


# ----------------------------------------------------------------------------
# Pallas kernels
# ----------------------------------------------------------------------------

def _molconv_update_kernel(xc_ref, idx_ref, w_ref, wup_ref, g_ref, b_ref, m_ref,
                           o_ref, *, k, n, npad, slope):
    """One batch item of the MolConv3 update:
    in-kernel neighbor gather (one-hot MXU) -> gated mix fc + w*(fn - fc) ->
    1x1 conv (bf16 MXU, f32 acc) -> LayerNorm over the (Cout, N, k) slab
    (padded lanes excluded, shifted variance) -> LeakyReLU -> k-sum -> mask."""
    cout = g_ref.shape[0]
    xc = xc_ref[...]                                           # (Cp, Npad) f32
    xc_b = xc.astype(jnp.bfloat16)
    wup = wup_ref[...]                                         # (Cout, Cp) bf16
    rows = lax.broadcasted_iota(jnp.int32, (npad, npad), 0)
    lane = lax.broadcasted_iota(jnp.int32, (1, npad), 1)
    lm = (lane < n).astype(jnp.float32)                        # (1, Npad)
    inv_cnt = 1.0 / float(cout * k * n)

    ys = []
    total = jnp.float32(0.0)
    for j in range(k):                                         # k is small & static
        lo, hi = j * npad, (j + 1) * npad
        idx_j = idx_ref[:, lo:hi]                              # (1, Npad) int32
        onehot = jnp.where(rows == idx_j, 1.0, 0.0).astype(jnp.bfloat16)
        fn_j = jnp.dot(xc_b, onehot, preferred_element_type=jnp.float32)
        w_j = w_ref[:, lo:hi]                                  # (1, Npad) gate
        mixed = xc + w_j * (fn_j - xc)                         # fc + w*(fn - fc)
        y_j = jnp.dot(wup, mixed.astype(jnp.bfloat16),
                      preferred_element_type=jnp.float32)      # (Cout, Npad)
        ys.append(y_j)
        total = total + jnp.sum(y_j * lm)

    mu = total * inv_cnt
    sq = jnp.float32(0.0)
    for y_j in ys:                                             # shifted variance
        c = (y_j - mu) * lm
        sq = sq + jnp.sum(c * c)
    inv_std = lax.rsqrt(sq * inv_cnt + EPS)

    acc = jnp.zeros((cout, npad), jnp.float32)
    for j in range(k):
        lo, hi = j * npad, (j + 1) * npad
        yn = (ys[j] - mu) * inv_std * g_ref[:, lo:hi].astype(jnp.float32) \
             + b_ref[:, lo:hi].astype(jnp.float32)
        acc = acc + jnp.where(yn >= 0.0, yn, slope * yn)       # 128-aligned k-sum
    o_ref[...] = acc * m_ref[...]


def _encoder_tail_kernel(*refs, num_x, n, npad, slope):
    """One batch item: accumulate per-layer 1x1-conv partial products (no VMEM
    concat) -> LayerNorm((emb, N)) -> LeakyReLU(0.2) -> masked max + avg pool."""
    x_refs = refs[:num_x]
    w_refs = refs[num_x:2 * num_x]
    g_ref, b_ref, m_ref, o_ref = refs[2 * num_x:]
    emb = g_ref.shape[0]
    lane = lax.broadcasted_iota(jnp.int32, (1, npad), 1)
    lm = (lane < n).astype(jnp.float32)
    inv_cnt = 1.0 / float(emb * n)

    y = jnp.zeros((emb, npad), jnp.float32)
    for xr, wr in zip(x_refs, w_refs):                         # y = W @ concat(xs)
        y = y + jnp.dot(wr[...], xr[...].astype(jnp.bfloat16),
                        preferred_element_type=jnp.float32)

    mu = jnp.sum(y * lm) * inv_cnt
    c = (y - mu) * lm
    var = jnp.sum(c * c) * inv_cnt                             # shifted variance
    yn = (y - mu) * lax.rsqrt(var + EPS) * g_ref[...].astype(jnp.float32) \
         + b_ref[...].astype(jnp.float32)
    yn = jnp.where(yn >= 0.0, yn, slope * yn)

    m = m_ref[...]                                             # (1, Npad)
    cnt = jnp.sum(m)
    ymax = jnp.max(jnp.where(m > 0.0, yn, jnp.float32(-3e38)), axis=1, keepdims=True)
    maxp = jnp.where(cnt > 0.0, ymax, 0.0)                     # guard all-masked rows
    avgp = jnp.sum(yn * m, axis=1, keepdims=True) / jnp.maximum(cnt, 0.1)
    # TODO(synk): a lane-dense (1, emb) store needs a sublane->lane transpose of
    # the pooled column; kept (emb, 1) since this store is tiny.
    o_ref[...] = maxp + avgp


def _decoder_kernel(*refs, block_meta, slope):
    """Fused MSDecoder: FCResBlocks (Linear no-bias -> LayerNorm -> LeakyReLU,
    nearest-interp residual: plain identity when dims match, else a bf16 0/1
    matrix) + final Linear.  Dropout is an eval-mode no-op.  All matmuls are
    bf16 x bf16 with f32 accumulation."""
    x_ref = refs[0]
    o_ref = refs[-1]
    prefs = refs[1:-1]

    def ln_rows(y, gg, bb):
        mu = jnp.mean(y, axis=1, keepdims=True)
        c = y - mu
        var = jnp.mean(c * c, axis=1, keepdims=True)           # shifted variance
        return c * lax.rsqrt(var + EPS) * gg + bb

    def lrelu(y):
        return jnp.where(y >= 0.0, y, slope * y)

    def mm(a, w_ref_):
        return jnp.dot(a.astype(jnp.bfloat16), w_ref_[...],
                       preferred_element_type=jnp.float32)

    h = x_ref[...]
    i = 0
    for has_p in block_meta:
        w1, g1, b1, w2, g2, b2, w3, g3, b3 = prefs[i:i + 9]
        i += 9
        if has_p:
            ident = mm(h, prefs[i])                            # bf16 0/1 interp matrix
            i += 1
        else:
            ident = h                                          # nearest interp == identity
        y = lrelu(ln_rows(mm(h, w1), g1[...], b1[...]))
        y = lrelu(ln_rows(mm(y, w2), g2[...], b2[...]))
        y = ln_rows(mm(y, w3), g3[...], b3[...])
        h = lrelu(y + ident)
    fc_w, fc_b = prefs[i], prefs[i + 1]
    o_ref[...] = mm(h, fc_w) + fc_b[...]


# ----------------------------------------------------------------------------
# Pallas wrappers
# ----------------------------------------------------------------------------

def _full_spec(shape):
    return pl.BlockSpec(shape, lambda *_: (0,) * len(shape))


def molconv_update_pallas(xc, idx_flat, w, wup, gamma, beta, mask3, *, k, n,
                          slope=0.02):
    """xc: (B, Cp, Npad) f32; idx_flat: (B, 1, k*Npad) int32 k-major neighbor
    ids; w: (B, 1, k*Npad) f32 gates; wup: (Cout, Cp) bf16; gamma/beta:
    (Cout, k*Npad) bf16; mask3: (B, 1, Npad) f32.  Returns (B, Cout, Npad)."""
    B, Cp, npad = xc.shape
    Cout = wup.shape[0]
    kNp = k * npad
    kernel = functools.partial(_molconv_update_kernel,
                               k=k, n=n, npad=npad, slope=slope)
    block_bytes = (_nbytes((Cp, npad), jnp.float32)
                   + _nbytes((1, kNp), jnp.int32)
                   + _nbytes((1, kNp), jnp.float32)
                   + _nbytes((1, npad), jnp.float32)
                   + _nbytes((Cout, npad), jnp.float32)
                   + _nbytes(wup.shape, wup.dtype)
                   + 2 * _nbytes(gamma.shape, gamma.dtype))
    return pl.pallas_call(
        kernel,
        out_shape=jax.ShapeDtypeStruct((B, Cout, npad), jnp.float32),
        grid=(B,),                                             # one item / grid step
        in_specs=[
            pl.BlockSpec((None, Cp, npad), lambda b: (b, 0, 0)),
            pl.BlockSpec((None, 1, kNp), lambda b: (b, 0, 0)),
            pl.BlockSpec((None, 1, kNp), lambda b: (b, 0, 0)),
            pl.BlockSpec((Cout, Cp), lambda b: (0, 0)),
            pl.BlockSpec((Cout, kNp), lambda b: (0, 0)),
            pl.BlockSpec((Cout, kNp), lambda b: (0, 0)),
            pl.BlockSpec((None, 1, npad), lambda b: (b, 0, 0)),
        ],
        out_specs=pl.BlockSpec((None, Cout, npad), lambda b: (b, 0, 0)),
        compiler_params=pltpu.CompilerParams(
            dimension_semantics=("parallel",),
            vmem_limit_bytes=_vmem_limit(block_bytes)),
    )(xc, idx_flat, w, wup, gamma, beta, mask3)


def encoder_tail_pallas(xs, conv_Ws, ln_g, ln_b, mask3, *, n, slope=0.2):
    """xs: per-layer outputs (B, Ci, Npad); conv_Ws: per-layer (emb, Ci) bf16
    column slabs of the Conv1d(emb, emb, 1) weight; ln_g/ln_b: (emb, Npad) bf16;
    mask3: (B, 1, Npad) f32.  Returns pooled embedding (B, emb) f32."""
    B = xs[0].shape[0]
    npad = xs[0].shape[2]
    emb = ln_g.shape[0]
    kernel = functools.partial(_encoder_tail_kernel,
                               num_x=len(xs), n=n, npad=npad, slope=slope)
    in_specs = [pl.BlockSpec((None, x.shape[1], npad), lambda b: (b, 0, 0)) for x in xs]
    in_specs += [_full_spec(w.shape) for w in conv_Ws]
    in_specs += [
        _full_spec((emb, npad)),
        _full_spec((emb, npad)),
        pl.BlockSpec((None, 1, npad), lambda b: (b, 0, 0)),
    ]
    block_bytes = (sum(_nbytes((x.shape[1], npad), x.dtype) for x in xs)
                   + sum(_nbytes(w.shape, w.dtype) for w in conv_Ws)
                   + 2 * _nbytes((emb, npad), ln_g.dtype)
                   + _nbytes((1, npad), jnp.float32)
                   + _nbytes((emb, 1), jnp.float32))
    out = pl.pallas_call(
        kernel,
        out_shape=jax.ShapeDtypeStruct((B, emb, 1), jnp.float32),
        grid=(B,),
        in_specs=in_specs,
        out_specs=pl.BlockSpec((None, emb, 1), lambda b: (b, 0, 0)),
        compiler_params=pltpu.CompilerParams(
            dimension_semantics=("parallel",),
            vmem_limit_bytes=_vmem_limit(block_bytes)),
    )(*xs, *conv_Ws, ln_g, ln_b, mask3)
    return out[:, :, 0]


def decoder_pallas(x, dparams, slope=0.2):
    """Fused MSDecoder (eval mode).  x: (B, D0) f32.
    TODO(synk): pipeline FCResBlocks over a grid (per-block weight BlockSpecs,
    persistent h in VMEM scratch) for production layer widths."""
    B = x.shape[0]
    args = [x]
    block_meta = []
    for bp in dparams['blocks']:
        args += [bp['W1t'], bp['g1'], bp['b1'], bp['W2t'], bp['g2'], bp['b2'],
                 bp['W3t'], bp['g3'], bp['b3']]
        has_p = 'P' in bp
        if has_p:
            args.append(bp['P'])
        block_meta.append(has_p)
    args += [dparams['fc_W'], dparams['fc_b']]
    kernel = functools.partial(_decoder_kernel, block_meta=tuple(block_meta),
                               slope=slope)
    block_bytes = sum(_nbytes(a.shape, a.dtype) for a in args) \
                  + _nbytes((B, 1), jnp.float32)
    return pl.pallas_call(
        kernel,
        out_shape=jax.ShapeDtypeStruct((B, 1), jnp.float32),
        grid=(1,),
        in_specs=[_full_spec(a.shape) for a in args],
        out_specs=_full_spec((B, 1)),
        compiler_params=pltpu.CompilerParams(
            dimension_semantics=("arbitrary",),
            vmem_limit_bytes=_vmem_limit(block_bytes)),
    )(*args)


# ----------------------------------------------------------------------------
# Plain-JAX glue (kNN / data-dependent gathers / tiny gate convs / plumbing)
# ----------------------------------------------------------------------------

def _ln_all(x, gamma, beta):
    """LayerNorm over all non-batch dims (matches nn.LayerNorm((C, N, k)))."""
    axes = tuple(range(1, x.ndim))
    mu = jnp.mean(x, axis=axes, keepdims=True)
    var = jnp.mean(jnp.square(x - mu), axis=axes, keepdims=True)
    return (x - mu) / jnp.sqrt(var + EPS) * gamma + beta


def molconv3_forward(x_l, mask3, p, *, k, n, npad):
    """x_l: (B, Cp, Npad) layer input (zeros beyond lane n). Returns (B, Cout, Npad)."""
    B = x_l.shape[0]
    xb = x_l[:, :, :n]                                             # (B, Cp, N)
    inner = jnp.einsum('bcn,bcm->bnm', xb, xb)                     # (B, N, N)
    xx = jnp.sum(xb * xb, axis=1)
    pairwise = 2.0 * inner - xx[:, :, None] - xx[:, None, :]       # neg sq. distance
    dist, idx = lax.top_k(pairwise, k)                             # (B, N, k)
    dist = -dist

    # ---- gate branch (small; plain-JAX glue).  Gram entries gathered from the
    # already-computed `inner`, so the (B, C, k, N) neighbor tensor never exists.
    idx0 = idx[:, :, 0]
    tmp = jnp.take_along_axis(inner, idx.reshape(B, n * k)[:, :, None], axis=1)
    tmp = tmp.reshape(B, n, k, n)                                  # inner[idx[n,j], :]
    sub = jnp.take_along_axis(tmp, idx0[:, :, None, None], axis=3)  # (B, N, k, 1)
    sub_gm = jnp.matmul(sub, jnp.transpose(sub, (0, 1, 3, 2)))     # (B, N, k, k)
    nrm = jnp.sqrt(jnp.sum(sub_gm * sub_gm, axis=1, keepdims=True))
    sub_gm = sub_gm / jnp.maximum(nrm, 1e-12)
    dist4 = dist[:, None, :, :]                                    # (B, 1, N, k)
    gm2 = jnp.transpose(sub_gm, (0, 3, 1, 2))                      # (B, k, N, k)
    w1 = jax.nn.sigmoid(_ln_all(dist4 * p['wd'], p['dln_g'], p['dln_b']))
    gg = jnp.einsum('oc,bcnk->bonk', p['wg'], gm2)
    w2 = jax.nn.sigmoid(_ln_all(gg, p['gln_g'], p['gln_b']))
    w = (w1 * w2)[:, 0]                                            # (B, N, k)
    w = jnp.transpose(w, (0, 2, 1))                                # (B, k, N)  (tiny)
    w = jnp.pad(w, ((0, 0), (0, 0), (0, npad - n))).reshape(B, 1, k * npad)

    # k-major neighbor ids, point axis padded to Npad (pad ids -> 0; dead lanes
    # are excluded from LN stats and zeroed by the output mask).
    idx_t = jnp.transpose(idx, (0, 2, 1)).astype(jnp.int32)        # (B, k, N)
    idx_flat = jnp.pad(idx_t, ((0, 0), (0, 0), (0, npad - n))).reshape(B, 1, k * npad)

    # Hot path (in-kernel gather + mix + 1x1 conv + LN + LeakyReLU + k-sum + mask).
    return molconv_update_pallas(x_l, idx_flat, w, p['Wup'], p['uln_g'],
                                 p['uln_b'], mask3, k=k, n=n)


def encoder_forward(x, mask, params, *, k):
    B, C, N = x.shape
    npad = _round_up(N, 128)                                       # lane-dense points
    cp0 = _round_up(C, 8)                                          # sublane-aligned ch.
    x0 = jnp.pad(x, ((0, 0), (0, cp0 - C), (0, npad - N)))
    mask_f = jnp.pad(mask.astype(jnp.float32), ((0, 0), (0, npad - N)))
    mask3 = mask_f[:, None, :]                                     # (B, 1, Npad)

    xs = []
    h = x0
    for p in params['molconvs']:
        h = molconv3_forward(h, mask3, p, k=k, n=N, npad=npad)
        xs.append(h)
    return encoder_tail_pallas(xs, params['conv_Ws'], params['conv_g'],
                               params['conv_b'], mask3, n=N)


def molnet_oth_forward(params, x, mask, env=None, idx_base=None, *, add_num, k):
    # idx_base accepted for API parity with the PyTorch module; the batched
    # in-kernel gather used here does not need it.
    h = encoder_forward(x, mask, params['encoder'], k=k)
    if add_num == 1:
        h = jnp.concatenate([h, env[:, None]], axis=1)
    elif add_num > 1:
        h = jnp.concatenate([h, env], axis=1)
    return decoder_pallas(h, params['decoder'])


# ----------------------------------------------------------------------------
# Deterministic parameter initialization (synthetic; no checkpoint load).
# Parameters are stored pre-laid-out (and pre-cast to bf16 where the kernels
# consume bf16); loading a real checkpoint needs a one-time transpose/pad/cast.
# ----------------------------------------------------------------------------

def init_params(key, cfg):
    N, k = cfg['max_atom_num'], cfg['k']
    npad = _round_up(N, 128)
    keys = iter(jax.random.split(key, 128))

    def nrm(shape, std, dtype=jnp.float32):
        return (jax.random.normal(next(keys), shape, jnp.float32) * std).astype(dtype)

    molconvs = []
    cin = cfg['in_dim']
    cp0 = _round_up(cin, 8)
    for i, cout in enumerate(cfg['encode_layers']):
        if i == 0:
            cin_eff = cin - 3                                      # remove_xyz=True
            w_eff = jax.random.normal(next(keys), (cout, cin_eff), jnp.float32) \
                    * (2.0 / (cin_eff + cout)) ** 0.5
            # remove_xyz + channel padding folded into zero 1x1-conv columns.
            wup = jnp.zeros((cout, cp0), jnp.float32).at[:, 3:cin].set(w_eff)
            wup = wup.astype(jnp.bfloat16)
        else:
            wup = nrm((cout, cin), (2.0 / (cin + cout)) ** 0.5, jnp.bfloat16)
        molconvs.append(dict(
            wd=nrm((), 1.0),
            dln_g=jnp.ones((1, N, k), jnp.float32), dln_b=jnp.zeros((1, N, k), jnp.float32),
            wg=nrm((1, k), (2.0 / (k + 1)) ** 0.5),
            gln_g=jnp.ones((1, N, k), jnp.float32), gln_b=jnp.zeros((1, N, k), jnp.float32),
            Wup=wup,
            # LayerNorm((cout, N, k)) affine in the kernel's (cout, k*Npad) layout;
            # bf16 since it is grid-invariant (halves DMA + double-buffered VMEM).
            uln_g=jnp.ones((cout, k * npad), jnp.bfloat16),
            uln_b=jnp.zeros((cout, k * npad), jnp.bfloat16),
        ))
        cin = cout

    emb = cfg['emb_dim']
    conv_W = nrm((emb, emb), (2.0 / emb) ** 0.5)                   # Conv1d(emb, emb, 1)
    # Pre-split per encoder layer so the tail kernel accumulates partial products
    # instead of concatenating layer outputs in VMEM.
    conv_Ws, off = [], 0
    for cout in cfg['encode_layers']:
        conv_Ws.append(conv_W[:, off:off + cout].astype(jnp.bfloat16))
        off += cout
    encoder = dict(
        molconvs=molconvs,
        conv_Ws=conv_Ws,
        conv_g=jnp.ones((emb, npad), jnp.bfloat16),                # LayerNorm((emb, N))
        conv_b=jnp.zeros((emb, npad), jnp.bfloat16),
    )

    blocks = []
    din = emb + cfg['add_num']
    for dout in cfg['decode_layers']:
        bp = dict(
            W1t=nrm((din, dout), 1.0, jnp.bfloat16),               # nn.Linear ~ N(0,1)
            W2t=nrm((dout, dout), 1.0, jnp.bfloat16),
            W3t=nrm((dout, dout), 1.0, jnp.bfloat16),
            g1=jnp.ones((1, dout), jnp.float32), b1=jnp.zeros((1, dout), jnp.float32),
            g2=jnp.ones((1, dout), jnp.float32), b2=jnp.zeros((1, dout), jnp.float32),
            g3=jnp.ones((1, dout), jnp.float32), b3=jnp.zeros((1, dout), jnp.float32),
        )
        if din != dout:
            # F.interpolate(mode='nearest') as a bf16 0/1 matrix; omitted entirely
            # (plain identity in-kernel) when in_dim == out_dim.
            src = np.minimum(np.floor(np.arange(dout) * (din / dout)).astype(np.int64),
                             din - 1)
            p_mat = np.zeros((din, dout), np.float32)
            p_mat[src, np.arange(dout)] = 1.0
            bp['P'] = jnp.asarray(p_mat, jnp.bfloat16)
        blocks.append(bp)
        din = dout
    decoder = dict(
        blocks=blocks,
        fc_W=nrm((cfg['decode_layers'][-1], 1), 1.0, jnp.bfloat16),
        fc_b=jnp.zeros((1, 1), jnp.float32),
    )
    return dict(encoder=encoder, decoder=decoder)


# ----------------------------------------------------------------------------

if __name__ == "__main__":
    cfg = dict(add_num=1, in_dim=8, encode_layers=[8, 8], emb_dim=16,
               max_atom_num=16, k=4, decode_layers=[32, 16], dropout=0.1)

    key = jax.random.PRNGKey(0)
    kp, kx, ke = jax.random.split(key, 3)
    params = init_params(kp, cfg)

    B, N = 2, cfg['max_atom_num']
    x = jax.random.normal(kx, (B, cfg['in_dim'], N), jnp.float32)
    valid = jnp.array([12, 9])
    mask = jnp.arange(N)[None, :] < valid[:, None]                 # (B, N) bool mask
    x = x * mask[:, None, :].astype(jnp.float32)                   # zero padded atoms
    env = jax.random.normal(ke, (B,), jnp.float32)

    out = molnet_oth_forward(params, x, mask, env=env,
                             add_num=cfg['add_num'], k=cfg['k'])
    out = jax.block_until_ready(out)
    assert out.shape == (B, 1), out.shape
    assert bool(jnp.all(jnp.isfinite(out)))
    print("KERNEL_OK")
</pallas_src>

<mosaic_0001>
module attributes {stable_mosaic.version = 11 : i64} {
  func.func @_molconv_update_kernel(%arg0: i32, %arg1: memref<1x8x128xf32, #tpu.memory_space<vmem>>, %arg2: memref<1x1x512xi32, #tpu.memory_space<vmem>>, %arg3: memref<1x1x512xf32, #tpu.memory_space<vmem>>, %arg4: memref<8x8xbf16, #tpu.memory_space<vmem>>, %arg5: memref<8x512xbf16, #tpu.memory_space<vmem>>, %arg6: memref<8x512xbf16, #tpu.memory_space<vmem>>, %arg7: memref<1x1x128xf32, #tpu.memory_space<vmem>>, %arg8: memref<1x8x128xf32, #tpu.memory_space<vmem>>) attributes {dimension_semantics = [#tpu.dimension_semantics<parallel>], iteration_bounds = array<i64: 2>, scalar_prefetch = 0 : i64, scratch_operands = 0 : i64, tpu.core_type = #tpu.core_type<tc>, window_params = [{transform_indices = @transform_0, window_bounds = array<i64: 1, 8, 128>}, {transform_indices = @transform_1, window_bounds = array<i64: 1, 1, 512>}, {transform_indices = @transform_2, window_bounds = array<i64: 1, 1, 512>}, {pipeline_mode = #tpu.pipeline_mode<synchronous>, transform_indices = @transform_3, window_bounds = array<i64: 8, 8>}, {pipeline_mode = #tpu.pipeline_mode<synchronous>, transform_indices = @transform_4, window_bounds = array<i64: 8, 512>}, {pipeline_mode = #tpu.pipeline_mode<synchronous>, transform_indices = @transform_5, window_bounds = array<i64: 8, 512>}, {transform_indices = @transform_6, window_bounds = array<i64: 1, 1, 128>}, {transform_indices = @transform_7, window_bounds = array<i64: 1, 8, 128>}]} {
    %c0 = arith.constant 0 : index
    %c0_0 = arith.constant 0 : index
    %c0_1 = arith.constant 0 : index
    %0 = vector.load %arg1[%c0, %c0_0, %c0_1] : memref<1x8x128xf32, #tpu.memory_space<vmem>>, vector<1x8x128xf32>
    %1 = vector.shape_cast %0 : vector<1x8x128xf32> to vector<8x128xf32>
    %2 = arith.truncf %1 : vector<8x128xf32> to vector<8x128xbf16>
    %c0_2 = arith.constant 0 : index
    %c0_3 = arith.constant 0 : index
    %3 = vector.load %arg4[%c0_2, %c0_3] : memref<8x8xbf16, #tpu.memory_space<vmem>>, vector<8x8xbf16>
    %4 = tpu.iota {dimensions = array<i32: 0>} : vector<128x128xi32>
    %5 = tpu.iota {dimensions = array<i32: 1>} : vector<1x128xi32>
    %c16_i32 = arith.constant 16 : i32
    %6 = vector.broadcast %c16_i32 : i32 to vector<1x128xi32>
    %7 = arith.cmpi slt, %5, %6 : vector<1x128xi32>
    %8 = arith.extui %7 : vector<1x128xi1> to vector<1x128xi32>
    %9 = arith.sitofp %8 : vector<1x128xi32> to vector<1x128xf32>
    %c0_4 = arith.constant 0 : index
    %c0_5 = arith.constant 0 : index
    %c0_6 = arith.constant 0 : index
    %10 = vector.load %arg2[%c0_4, %c0_5, %c0_6] : memref<1x1x512xi32, #tpu.memory_space<vmem>>, vector<1x1x128xi32>
    %11 = vector.shape_cast %10 : vector<1x1x128xi32> to vector<1x128xi32>
    %12 = vector.broadcast %11 : vector<1x128xi32> to vector<128x128xi32>
    %13 = arith.cmpi eq, %4, %12 : vector<128x128xi32>
    %cst = arith.constant 1.000000e+00 : f32
    %cst_7 = arith.constant 0.000000e+00 : f32
    %14 = vector.broadcast %cst : f32 to vector<128x128xf32>
    %15 = vector.broadcast %cst_7 : f32 to vector<128x128xf32>
    %16 = arith.select %13, %14, %15 : vector<128x128xi1>, vector<128x128xf32>
    %17 = arith.truncf %16 : vector<128x128xf32> to vector<128x128xbf16>
    %cst_8 = arith.constant dense<0.000000e+00> : vector<8x128xf32>
    %18 = tpu.matmul %2, %17, %cst_8 {dimension_numbers = #tpu.dot_dimension_numbers<[1], [0], [0], [1], [0, 0, 1, 1], [], []>} : vector<8x128xbf16>, vector<128x128xbf16>, vector<8x128xf32> -> vector<8x128xf32>
    %c0_9 = arith.constant 0 : index
    %c0_10 = arith.constant 0 : index
    %c0_11 = arith.constant 0 : index
    %19 = vector.load %arg3[%c0_9, %c0_10, %c0_11] : memref<1x1x512xf32, #tpu.memory_space<vmem>>, vector<1x1x128xf32>
    %20 = vector.shape_cast %19 : vector<1x1x128xf32> to vector<1x128xf32>
    %21 = arith.subf %18, %1 : vector<8x128xf32>
    %22 = vector.broadcast %20 : vector<1x128xf32> to vector<8x128xf32>
    %23 = arith.mulf %22, %21 : vector<8x128xf32>
    %24 = arith.addf %1, %23 : vector<8x128xf32>
    %25 = arith.truncf %24 : vector<8x128xf32> to vector<8x128xbf16>
    %cst_12 = arith.constant dense<0.000000e+00> : vector<8x128xf32>
    %26 = tpu.matmul %3, %25, %cst_12 {dimension_numbers = #tpu.dot_dimension_numbers<[1], [0], [0], [1], [0, 0, 1, 1], [], []>} : vector<8x8xbf16>, vector<8x128xbf16>, vector<8x128xf32> -> vector<8x128xf32>
    %27 = vector.broadcast %9 : vector<1x128xf32> to vector<8x128xf32>
    %28 = arith.mulf %26, %27 : vector<8x128xf32>
    %29 = vector.shape_cast %28 : vector<8x128xf32> to vector<1x8x128xf32>
    %cst_13 = arith.constant dense<0.000000e+00> : vector<1xf32>
    %30 = vector.multi_reduction <add>, %29, %cst_13 [1, 2] : vector<1x8x128xf32> to vector<1xf32>
    %31 = vector.shape_cast %30 : vector<1xf32> to vector<1x1x1xf32>
    %32 = vector.extract %31[0, 0, 0] : f32 from vector<1x1x1xf32>
    %cst_14 = arith.constant 0.000000e+00 : f32
    %33 = arith.addf %cst_14, %32 : f32
    %c0_15 = arith.constant 0 : index
    %c0_16 = arith.constant 0 : index
    %c128 = arith.constant 128 : index
    %34 = vector.load %arg2[%c0_15, %c0_16, %c128] : memref<1x1x512xi32, #tpu.memory_space<vmem>>, vector<1x1x128xi32>
    %35 = vector.shape_cast %34 : vector<1x1x128xi32> to vector<1x128xi32>
    %36 = vector.broadcast %35 : vector<1x128xi32> to vector<128x128xi32>
    %37 = arith.cmpi eq, %4, %36 : vector<128x128xi32>
    %cst_17 = arith.constant 1.000000e+00 : f32
    %cst_18 = arith.constant 0.000000e+00 : f32
    %38 = vector.broadcast %cst_17 : f32 to vector<128x128xf32>
    %39 = vector.broadcast %cst_18 : f32 to vector<128x128xf32>
    %40 = arith.select %37, %38, %39 : vector<128x128xi1>, vector<128x128xf32>
    %41 = arith.truncf %40 : vector<128x128xf32> to vector<128x128xbf16>
    %cst_19 = arith.constant dense<0.000000e+00> : vector<8x128xf32>
    %42 = tpu.matmul %2, %41, %cst_19 {dimension_numbers = #tpu.dot_dimension_numbers<[1], [0], [0], [1], [0, 0, 1, 1], [], []>} : vector<8x128xbf16>, vector<128x128xbf16>, vector<8x128xf32> -> vector<8x128xf32>
    %c0_20 = arith.constant 0 : index
    %c0_21 = arith.constant 0 : index
    %c128_22 = arith.constant 128 : index
    %43 = vector.load %arg3[%c0_20, %c0_21, %c128_22] : memref<1x1x512xf32, #tpu.memory_space<vmem>>, vector<1x1x128xf32>
    %44 = vector.shape_cast %43 : vector<1x1x128xf32> to vector<1x128xf32>
    %45 = arith.subf %42, %1 : vector<8x128xf32>
    %46 = vector.broadcast %44 : vector<1x128xf32> to vector<8x128xf32>
    %47 = arith.mulf %46, %45 : vector<8x128xf32>
    %48 = arith.addf %1, %47 : vector<8x128xf32>
    %49 = arith.truncf %48 : vector<8x128xf32> to vector<8x128xbf16>
    %cst_23 = arith.constant dense<0.000000e+00> : vector<8x128xf32>
    %50 = tpu.matmul %3, %49, %cst_23 {dimension_numbers = #tpu.dot_dimension_numbers<[1], [0], [0], [1], [0, 0, 1, 1], [], []>} : vector<8x8xbf16>, vector<8x128xbf16>, vector<8x128xf32> -> vector<8x128xf32>
    %51 = vector.broadcast %9 : vector<1x128xf32> to vector<8x128xf32>
    %52 = arith.mulf %50, %51 : vector<8x128xf32>
    %53 = vector.shape_cast %52 : vector<8x128xf32> to vector<1x8x128xf32>
    %cst_24 = arith.constant dense<0.000000e+00> : vector<1xf32>
    %54 = vector.multi_reduction <add>, %53, %cst_24 [1, 2] : vector<1x8x128xf32> to vector<1xf32>
    %55 = vector.shape_cast %54 : vector<1xf32> to vector<1x1x1xf32>
    %56 = vector.extract %55[0, 0, 0] : f32 from vector<1x1x1xf32>
    %57 = arith.addf %33, %56 : f32
    %c0_25 = arith.constant 0 : index
    %c0_26 = arith.constant 0 : index
    %c256 = arith.constant 256 : index
    %58 = vector.load %arg2[%c0_25, %c0_26, %c256] : memref<1x1x512xi32, #tpu.memory_space<vmem>>, vector<1x1x128xi32>
    %59 = vector.shape_cast %58 : vector<1x1x128xi32> to vector<1x128xi32>
    %60 = vector.broadcast %59 : vector<1x128xi32> to vector<128x128xi32>
    %61 = arith.cmpi eq, %4, %60 : vector<128x128xi32>
    %cst_27 = arith.constant 1.000000e+00 : f32
    %cst_28 = arith.constant 0.000000e+00 : f32
    %62 = vector.broadcast %cst_27 : f32 to vector<128x128xf32>
    %63 = vector.broadcast %cst_28 : f32 to vector<128x128xf32>
    %64 = arith.select %61, %62, %63 : vector<128x128xi1>, vector<128x128xf32>
    %65 = arith.truncf %64 : vector<128x128xf32> to vector<128x128xbf16>
    %cst_29 = arith.constant dense<0.000000e+00> : vector<8x128xf32>
    %66 = tpu.matmul %2, %65, %cst_29 {dimension_numbers = #tpu.dot_dimension_numbers<[1], [0], [0], [1], [0, 0, 1, 1], [], []>} : vector<8x128xbf16>, vector<128x128xbf16>, vector<8x128xf32> -> vector<8x128xf32>
    %c0_30 = arith.constant 0 : index
    %c0_31 = arith.constant 0 : index
    %c256_32 = arith.constant 256 : index
    %67 = vector.load %arg3[%c0_30, %c0_31, %c256_32] : memref<1x1x512xf32, #tpu.memory_space<vmem>>, vector<1x1x128xf32>
    %68 = vector.shape_cast %67 : vector<1x1x128xf32> to vector<1x128xf32>
    %69 = arith.subf %66, %1 : vector<8x128xf32>
    %70 = vector.broadcast %68 : vector<1x128xf32> to vector<8x128xf32>
    %71 = arith.mulf %70, %69 : vector<8x128xf32>
    %72 = arith.addf %1, %71 : vector<8x128xf32>
    %73 = arith.truncf %72 : vector<8x128xf32> to vector<8x128xbf16>
    %cst_33 = arith.constant dense<0.000000e+00> : vector<8x128xf32>
    %74 = tpu.matmul %3, %73, %cst_33 {dimension_numbers = #tpu.dot_dimension_numbers<[1], [0], [0], [1], [0, 0, 1, 1], [], []>} : vector<8x8xbf16>, vector<8x128xbf16>, vector<8x128xf32> -> vector<8x128xf32>
    %75 = vector.broadcast %9 : vector<1x128xf32> to vector<8x128xf32>
    %76 = arith.mulf %74, %75 : vector<8x128xf32>
    %77 = vector.shape_cast %76 : vector<8x128xf32> to vector<1x8x128xf32>
    %cst_34 = arith.constant dense<0.000000e+00> : vector<1xf32>
    %78 = vector.multi_reduction <add>, %77, %cst_34 [1, 2] : vector<1x8x128xf32> to vector<1xf32>
    %79 = vector.shape_cast %78 : vector<1xf32> to vector<1x1x1xf32>
    %80 = vector.extract %79[0, 0, 0] : f32 from vector<1x1x1xf32>
    %81 = arith.addf %57, %80 : f32
    %c0_35 = arith.constant 0 : index
    %c0_36 = arith.constant 0 : index
    %c384 = arith.constant 384 : index
    %82 = vector.load %arg2[%c0_35, %c0_36, %c384] : memref<1x1x512xi32, #tpu.memory_space<vmem>>, vector<1x1x128xi32>
    %83 = vector.shape_cast %82 : vector<1x1x128xi32> to vector<1x128xi32>
    %84 = vector.broadcast %83 : vector<1x128xi32> to vector<128x128xi32>
    %85 = arith.cmpi eq, %4, %84 : vector<128x128xi32>
    %cst_37 = arith.constant 1.000000e+00 : f32
    %cst_38 = arith.constant 0.000000e+00 : f32
    %86 = vector.broadcast %cst_37 : f32 to vector<128x128xf32>
    %87 = vector.broadcast %cst_38 : f32 to vector<128x128xf32>
    %88 = arith.select %85, %86, %87 : vector<128x128xi1>, vector<128x128xf32>
    %89 = arith.truncf %88 : vector<128x128xf32> to vector<128x128xbf16>
    %cst_39 = arith.constant dense<0.000000e+00> : vector<8x128xf32>
    %90 = tpu.matmul %2, %89, %cst_39 {dimension_numbers = #tpu.dot_dimension_numbers<[1], [0], [0], [1], [0, 0, 1, 1], [], []>} : vector<8x128xbf16>, vector<128x128xbf16>, vector<8x128xf32> -> vector<8x128xf32>
    %c0_40 = arith.constant 0 : index
    %c0_41 = arith.constant 0 : index
    %c384_42 = arith.constant 384 : index
    %91 = vector.load %arg3[%c0_40, %c0_41, %c384_42] : memref<1x1x512xf32, #tpu.memory_space<vmem>>, vector<1x1x128xf32>
    %92 = vector.shape_cast %91 : vector<1x1x128xf32> to vector<1x128xf32>
    %93 = arith.subf %90, %1 : vector<8x128xf32>
    %94 = vector.broadcast %92 : vector<1x128xf32> to vector<8x128xf32>
    %95 = arith.mulf %94, %93 : vector<8x128xf32>
    %96 = arith.addf %1, %95 : vector<8x128xf32>
    %97 = arith.truncf %96 : vector<8x128xf32> to vector<8x128xbf16>
    %cst_43 = arith.constant dense<0.000000e+00> : vector<8x128xf32>
    %98 = tpu.matmul %3, %97, %cst_43 {dimension_numbers = #tpu.dot_dimension_numbers<[1], [0], [0], [1], [0, 0, 1, 1], [], []>} : vector<8x8xbf16>, vector<8x128xbf16>, vector<8x128xf32> -> vector<8x128xf32>
    %99 = vector.broadcast %9 : vector<1x128xf32> to vector<8x128xf32>
    %100 = arith.mulf %98, %99 : vector<8x128xf32>
    %101 = vector.shape_cast %100 : vector<8x128xf32> to vector<1x8x128xf32>
    %cst_44 = arith.constant dense<0.000000e+00> : vector<1xf32>
    %102 = vector.multi_reduction <add>, %101, %cst_44 [1, 2] : vector<1x8x128xf32> to vector<1xf32>
    %103 = vector.shape_cast %102 : vector<1xf32> to vector<1x1x1xf32>
    %104 = vector.extract %103[0, 0, 0] : f32 from vector<1x1x1xf32>
    %105 = arith.addf %81, %104 : f32
    %cst_45 = arith.constant 0.001953125 : f32
    %106 = arith.mulf %105, %cst_45 : f32
    %107 = vector.broadcast %106 : f32 to vector<8x128xf32>
    %108 = arith.subf %26, %107 : vector<8x128xf32>
    %109 = vector.broadcast %9 : vector<1x128xf32> to vector<8x128xf32>
    %110 = arith.mulf %108, %109 : vector<8x128xf32>
    %111 = arith.mulf %110, %110 : vector<8x128xf32>
    %112 = vector.shape_cast %111 : vector<8x128xf32> to vector<1x8x128xf32>
    %cst_46 = arith.constant dense<0.000000e+00> : vector<1xf32>
    %113 = vector.multi_reduction <add>, %112, %cst_46 [1, 2] : vector<1x8x128xf32> to vector<1xf32>
    %114 = vector.shape_cast %113 : vector<1xf32> to vector<1x1x1xf32>
    %115 = vector.extract %114[0, 0, 0] : f32 from vector<1x1x1xf32>
    %cst_47 = arith.constant 0.000000e+00 : f32
    %116 = arith.addf %cst_47, %115 : f32
    %117 = vector.broadcast %106 : f32 to vector<8x128xf32>
    %118 = arith.subf %50, %117 : vector<8x128xf32>
    %119 = vector.broadcast %9 : vector<1x128xf32> to vector<8x128xf32>
    %120 = arith.mulf %118, %119 : vector<8x128xf32>
    %121 = arith.mulf %120, %120 : vector<8x128xf32>
    %122 = vector.shape_cast %121 : vector<8x128xf32> to vector<1x8x128xf32>
    %cst_48 = arith.constant dense<0.000000e+00> : vector<1xf32>
    %123 = vector.multi_reduction <add>, %122, %cst_48 [1, 2] : vector<1x8x128xf32> to vector<1xf32>
    %124 = vector.shape_cast %123 : vector<1xf32> to vector<1x1x1xf32>
    %125 = vector.extract %124[0, 0, 0] : f32 from vector<1x1x1xf32>
    %126 = arith.addf %116, %125 : f32
    %127 = vector.broadcast %106 : f32 to vector<8x128xf32>
    %128 = arith.subf %74, %127 : vector<8x128xf32>
    %129 = vector.broadcast %9 : vector<1x128xf32> to vector<8x128xf32>
    %130 = arith.mulf %128, %129 : vector<8x128xf32>
    %131 = arith.mulf %130, %130 : vector<8x128xf32>
    %132 = vector.shape_cast %131 : vector<8x128xf32> to vector<1x8x128xf32>
    %cst_49 = arith.constant dense<0.000000e+00> : vector<1xf32>
    %133 = vector.multi_reduction <add>, %132, %cst_49 [1, 2] : vector<1x8x128xf32> to vector<1xf32>
    %134 = vector.shape_cast %133 : vector<1xf32> to vector<1x1x1xf32>
    %135 = vector.extract %134[0, 0, 0] : f32 from vector<1x1x1xf32>
    %136 = arith.addf %126, %135 : f32
    %137 = vector.broadcast %106 : f32 to vector<8x128xf32>
    %138 = arith.subf %98, %137 : vector<8x128xf32>
    %139 = vector.broadcast %9 : vector<1x128xf32> to vector<8x128xf32>
    %140 = arith.mulf %138, %139 : vector<8x128xf32>
    %141 = arith.mulf %140, %140 : vector<8x128xf32>
    %142 = vector.shape_cast %141 : vector<8x128xf32> to vector<1x8x128xf32>
    %cst_50 = arith.constant dense<0.000000e+00> : vector<1xf32>
    %143 = vector.multi_reduction <add>, %142, %cst_50 [1, 2] : vector<1x8x128xf32> to vector<1xf32>
    %144 = vector.shape_cast %143 : vector<1xf32> to vector<1x1x1xf32>
    %145 = vector.extract %144[0, 0, 0] : f32 from vector<1x1x1xf32>
    %146 = arith.addf %136, %145 : f32
    %cst_51 = arith.constant 0.001953125 : f32
    %147 = arith.mulf %146, %cst_51 : f32
    %cst_52 = arith.constant 9.99999974E-6 : f32
    %148 = arith.addf %147, %cst_52 : f32
    %149 = math.rsqrt %148 : f32
    %cst_53 = arith.constant 0.000000e+00 : f32
    %150 = vector.broadcast %cst_53 : f32 to vector<8x128xf32>
    %151 = vector.broadcast %106 : f32 to vector<8x128xf32>
    %152 = arith.subf %26, %151 : vector<8x128xf32>
    %153 = vector.broadcast %149 : f32 to vector<8x128xf32>
    %154 = arith.mulf %152, %153 : vector<8x128xf32>
    %c0_54 = arith.constant 0 : index
    %c0_55 = arith.constant 0 : index
    %155 = vector.load %arg5[%c0_54, %c0_55] : memref<8x512xbf16, #tpu.memory_space<vmem>>, vector<8x128xbf16>
    %156 = arith.extf %155 : vector<8x128xbf16> to vector<8x128xf32>
    %157 = arith.mulf %154, %156 : vector<8x128xf32>
    %c0_56 = arith.constant 0 : index
    %c0_57 = arith.constant 0 : index
    %158 = vector.load %arg6[%c0_56, %c0_57] : memref<8x512xbf16, #tpu.memory_space<vmem>>, vector<8x128xbf16>
    %159 = arith.extf %158 : vector<8x128xbf16> to vector<8x128xf32>
    %160 = arith.addf %157, %159 : vector<8x128xf32>
    %cst_58 = arith.constant 0.000000e+00 : f32
    %161 = vector.broadcast %cst_58 : f32 to vector<8x128xf32>
    %162 = arith.cmpf oge, %160, %161 : vector<8x128xf32>
    %cst_59 = arith.constant 2.000000e-02 : f32
    %163 = vector.broadcast %cst_59 : f32 to vector<8x128xf32>
    %164 = arith.mulf %163, %160 : vector<8x128xf32>
    %165 = arith.select %162, %160, %164 : vector<8x128xi1>, vector<8x128xf32>
    %166 = arith.addf %150, %165 : vector<8x128xf32>
    %167 = vector.broadcast %106 : f32 to vector<8x128xf32>
    %168 = arith.subf %50, %167 : vector<8x128xf32>
    %169 = vector.broadcast %149 : f32 to vector<8x128xf32>
    %170 = arith.mulf %168, %169 : vector<8x128xf32>
    %c0_60 = arith.constant 0 : index
    %c128_61 = arith.constant 128 : index
    %171 = vector.load %arg5[%c0_60, %c128_61] : memref<8x512xbf16, #tpu.memory_space<vmem>>, vector<8x128xbf16>
    %172 = arith.extf %171 : vector<8x128xbf16> to vector<8x128xf32>
    %173 = arith.mulf %170, %172 : vector<8x128xf32>
    %c0_62 = arith.constant 0 : index
    %c128_63 = arith.constant 128 : index
    %174 = vector.load %arg6[%c0_62, %c128_63] : memref<8x512xbf16, #tpu.memory_space<vmem>>, vector<8x128xbf16>
    %175 = arith.extf %174 : vector<8x128xbf16> to vector<8x128xf32>
    %176 = arith.addf %173, %175 : vector<8x128xf32>
    %cst_64 = arith.constant 0.000000e+00 : f32
    %177 = vector.broadcast %cst_64 : f32 to vector<8x128xf32>
    %178 = arith.cmpf oge, %176, %177 : vector<8x128xf32>
    %cst_65 = arith.constant 2.000000e-02 : f32
    %179 = vector.broadcast %cst_65 : f32 to vector<8x128xf32>
    %180 = arith.mulf %179, %176 : vector<8x128xf32>
    %181 = arith.select %178, %176, %180 : vector<8x128xi1>, vector<8x128xf32>
    %182 = arith.addf %166, %181 : vector<8x128xf32>
    %183 = vector.broadcast %106 : f32 to vector<8x128xf32>
    %184 = arith.subf %74, %183 : vector<8x128xf32>
    %185 = vector.broadcast %149 : f32 to vector<8x128xf32>
    %186 = arith.mulf %184, %185 : vector<8x128xf32>
    %c0_66 = arith.constant 0 : index
    %c256_67 = arith.constant 256 : index
    %187 = vector.load %arg5[%c0_66, %c256_67] : memref<8x512xbf16, #tpu.memory_space<vmem>>, vector<8x128xbf16>
    %188 = arith.extf %187 : vector<8x128xbf16> to vector<8x128xf32>
    %189 = arith.mulf %186, %188 : vector<8x128xf32>
    %c0_68 = arith.constant 0 : index
    %c256_69 = arith.constant 256 : index
    %190 = vector.load %arg6[%c0_68, %c256_69] : memref<8x512xbf16, #tpu.memory_space<vmem>>, vector<8x128xbf16>
    %191 = arith.extf %190 : vector<8x128xbf16> to vector<8x128xf32>
    %192 = arith.addf %189, %191 : vector<8x128xf32>
    %cst_70 = arith.constant 0.000000e+00 : f32
    %193 = vector.broadcast %cst_70 : f32 to vector<8x128xf32>
    %194 = arith.cmpf oge, %192, %193 : vector<8x128xf32>
    %cst_71 = arith.constant 2.000000e-02 : f32
    %195 = vector.broadcast %cst_71 : f32 to vector<8x128xf32>
    %196 = arith.mulf %195, %192 : vector<8x128xf32>
    %197 = arith.select %194, %192, %196 : vector<8x128xi1>, vector<8x128xf32>
    %198 = arith.addf %182, %197 : vector<8x128xf32>
    %199 = vector.broadcast %106 : f32 to vector<8x128xf32>
    %200 = arith.subf %98, %199 : vector<8x128xf32>
    %201 = vector.broadcast %149 : f32 to vector<8x128xf32>
    %202 = arith.mulf %200, %201 : vector<8x128xf32>
    %c0_72 = arith.constant 0 : index
    %c384_73 = arith.constant 384 : index
    %203 = vector.load %arg5[%c0_72, %c384_73] : memref<8x512xbf16, #tpu.memory_space<vmem>>, vector<8x128xbf16>
    %204 = arith.extf %203 : vector<8x128xbf16> to vector<8x128xf32>
    %205 = arith.mulf %202, %204 : vector<8x128xf32>
    %c0_74 = arith.constant 0 : index
    %c384_75 = arith.constant 384 : index
    %206 = vector.load %arg6[%c0_74, %c384_75] : memref<8x512xbf16, #tpu.memory_space<vmem>>, vector<8x128xbf16>
    %207 = arith.extf %206 : vector<8x128xbf16> to vector<8x128xf32>
    %208 = arith.addf %205, %207 : vector<8x128xf32>
    %cst_76 = arith.constant 0.000000e+00 : f32
    %209 = vector.broadcast %cst_76 : f32 to vector<8x128xf32>
    %210 = arith.cmpf oge, %208, %209 : vector<8x128xf32>
    %cst_77 = arith.constant 2.000000e-02 : f32
    %211 = vector.broadcast %cst_77 : f32 to vector<8x128xf32>
    %212 = arith.mulf %211, %208 : vector<8x128xf32>
    %213 = arith.select %210, %208, %212 : vector<8x128xi1>, vector<8x128xf32>
    %214 = arith.addf %198, %213 : vector<8x128xf32>
    %c0_78 = arith.constant 0 : index
    %c0_79 = arith.constant 0 : index
    %c0_80 = arith.constant 0 : index
    %215 = vector.load %arg7[%c0_78, %c0_79, %c0_80] : memref<1x1x128xf32, #tpu.memory_space<vmem>>, vector<1x1x128xf32>
    %216 = vector.shape_cast %215 : vector<1x1x128xf32> to vector<1x128xf32>
    %217 = vector.broadcast %216 : vector<1x128xf32> to vector<8x128xf32>
    %218 = arith.mulf %214, %217 : vector<8x128xf32>
    %c0_81 = arith.constant 0 : index
    %c0_82 = arith.constant 0 : index
    %c0_83 = arith.constant 0 : index
    %219 = vector.load %arg8[%c0_81, %c0_82, %c0_83] : memref<1x8x128xf32, #tpu.memory_space<vmem>>, vector<1x8x128xf32>
    %220 = vector.shape_cast %219 : vector<1x8x128xf32> to vector<8x128xf32>
    %221 = vector.shape_cast %218 : vector<8x128xf32> to vector<1x8x128xf32>
    tpu.vector_store %arg8[%c0_81, %c0_82, %c0_83], %221 {strides = array<i32>} : memref<1x8x128xf32, #tpu.memory_space<vmem>>, vector<1x8x128xf32>,
    return
  }
  func.func @transform_0(%arg0: i32) -> (i32, i32, i32) {
    %c0_i32 = arith.constant 0 : i32
    %c0_i32_0 = arith.constant 0 : i32
    %c0_i32_1 = arith.constant 0 : i32
    return %arg0, %c0_i32, %c0_i32_0 : i32, i32, i32
  }
  func.func @transform_1(%arg0: i32) -> (i32, i32, i32) {
    %c0_i32 = arith.constant 0 : i32
    %c0_i32_0 = arith.constant 0 : i32
    %c0_i32_1 = arith.constant 0 : i32
    return %arg0, %c0_i32, %c0_i32_0 : i32, i32, i32
  }
  func.func @transform_2(%arg0: i32) -> (i32, i32, i32) {
    %c0_i32 = arith.constant 0 : i32
    %c0_i32_0 = arith.constant 0 : i32
    %c0_i32_1 = arith.constant 0 : i32
    return %arg0, %c0_i32, %c0_i32_0 : i32, i32, i32
  }
  func.func @transform_3(%arg0: i32) -> (i32, i32) {
    %c0_i32 = arith.constant 0 : i32
    %c0_i32_0 = arith.constant 0 : i32
    %c0_i32_1 = arith.constant 0 : i32
    return %c0_i32, %c0_i32_0 : i32, i32
  }
  func.func @transform_4(%arg0: i32) -> (i32, i32) {
    %c0_i32 = arith.constant 0 : i32
    %c0_i32_0 = arith.constant 0 : i32
    %c0_i32_1 = arith.constant 0 : i32
    return %c0_i32, %c0_i32_0 : i32, i32
  }
  func.func @transform_5(%arg0: i32) -> (i32, i32) {
    %c0_i32 = arith.constant 0 : i32
    %c0_i32_0 = arith.constant 0 : i32
    %c0_i32_1 = arith.constant 0 : i32
    return %c0_i32, %c0_i32_0 : i32, i32
  }
  func.func @transform_6(%arg0: i32) -> (i32, i32, i32) {
    %c0_i32 = arith.constant 0 : i32
    %c0_i32_0 = arith.constant 0 : i32
    %c0_i32_1 = arith.constant 0 : i32
    return %arg0, %c0_i32, %c0_i32_0 : i32, i32, i32
  }
  func.func @transform_7(%arg0: i32) -> (i32, i32, i32) {
    %c0_i32 = arith.constant 0 : i32
    %c0_i32_0 = arith.constant 0 : i32
    %c0_i32_1 = arith.constant 0 : i32
    return %arg0, %c0_i32, %c0_i32_0 : i32, i32, i32
  }
}

</mosaic_0001>

<llo_original>
// kernel: tpu_custom_call.1
$region0: #{tpu_custom_call.1}
  #allocation0 [shape = 'u32[]', space=smem, size = 0x4, offset = 0x4, fixed_abs, tag = 'smem constant byte address 0x4 - core index']
  #allocation1 [shape = 'u32[144,128]{1,0:T(1,128)}', space=vmem, size = 0x12000, scoped, tag = 'internal scratch']
  %s0 = inlined_call_operand.hbm [shape: f32[2,8,128], index: 0, kind: input, shape index: {}]
  %s1 = inlined_call_operand.hbm [shape: s32[2,1,512], index: 1, kind: input, shape index: {}]
  %s2 = inlined_call_operand.hbm [shape: f32[2,1,512], index: 2, kind: input, shape index: {}]
  %s3 = inlined_call_operand.hbm [shape: bf16[8,8], index: 3, kind: input, shape index: {}]
  %s4 = inlined_call_operand.hbm [shape: bf16[8,512], index: 4, kind: input, shape index: {}]
  %s5 = inlined_call_operand.vmem [shape: bf16[8,512], index: 5, kind: input, shape index: {}]
  %s6 = inlined_call_operand.vmem [shape: f32[2,1,128], index: 6, kind: input, shape index: {}]
  %s7 = inlined_call_operand.hbm [shape: f32[2,8,128], index: 7, kind: output, shape index: {}]
  %s8 = sld [smem:[#allocation0]]
  $region81: #{tpu_custom_call.1} parent=0
    _
  %s10 = ssub.s32 1, %s8
  %s11 = scalar_select 0, %s10, %s8
  $region1: #{tpu_custom_call.1} parent=0
    #allocation2 [shape = 'u8[8192]{0}', space=vmem, size = 0x2000, scoped, tag = 'input window, operand 0']
    #allocation3 [shape = 's32[2]{0}', space=sflag, size = 0x8, scoped, tag = 'scoped memory for tpu_custom_call.1']
    #allocation4 [shape = 's32[2]{0}', space=sflag, size = 0x8, scoped, tag = 'scoped memory for tpu_custom_call.1']
    #allocation5 [shape = 'u8[4096]{0}', space=vmem, size = 0x1000, scoped, tag = 'input window, operand 1']
    #allocation6 [shape = 's32[2]{0}', space=sflag, size = 0x8, scoped, tag = 'scoped memory for tpu_custom_call.1']
    #allocation7 [shape = 'u8[4096]{0}', space=vmem, size = 0x1000, scoped, tag = 'input window, operand 2']
    #allocation8 [shape = 'u8[2048]{0}', space=vmem, size = 0x800, scoped, tag = 'input window, operand 3, single buffered']
    #allocation9 [shape = 's32[1]{0}', space=sflag, size = 0x4, scoped, tag = 'scoped memory for tpu_custom_call.1']
    #allocation10 [shape = 'u8[8192]{0}', space=vmem, size = 0x2000, scoped, tag = 'input window, operand 4, single buffered']
    #allocation11 [shape = 'u8[8192]{0}', space=vmem, size = 0x2000, scoped, tag = 'output window, operand 0']
    %12 = vsyncpa [#allocation3], 0
    %s13 = scalar_lea.sflag [#allocation3], 1
    %14 = vsyncpa %s13, 0
    %15 = vsyncpa [#allocation6], 0
    %s16 = scalar_lea.sflag [#allocation6], 1
    %17 = vsyncpa %s16, 0
    %18 = vsyncpa [#allocation9], 0
    %19 = vsyncpa [#allocation4], 0
    %s20 = scalar_lea.sflag [#allocation4], 1
    %21 = vsyncpa %s20, 0
    loop: start=0, step=1, limit=4
    $region2: #{tpu_custom_call.1} parent=1 // loop_pre_header
      _
    $region3: #{tpu_custom_call.1} parent=1 // loop_header
      %s23 = sphi 0, %s27
      %p24 = scmp.ge.s32.totalorder %s23, 4
      %s33 = sphi 0, %s35
      %s36 = sphi 0, %s33
      %s37 = sphi 0, %s36
      %s53 = sphi 0, %s37
      %s59 = sphi 0, %s61
      %s62 = sphi 0, %s59
      %s63 = sphi 0, %s62
      %s79 = sphi 0, %s63
      %s85 = sphi 0, %s87
      %s88 = sphi 0, %s85
      %s89 = sphi 0, %s88
      %s105 = sphi 0, %s89
      %s109 = sphi 0, %s109
      %s111 = sphi 0, %s109
      %s112 = sphi 0, %s111
      %s126 = sphi 0, %s112
      %s130 = sphi 0, %s130
      %s132 = sphi 0, %s130
      %s133 = sphi 0, %s132
      %s147 = sphi 0, %s133
      %s151 = sphi 0, %s151
      %s153 = sphi 0, %s151
      %s154 = sphi 0, %s153
      %s168 = sphi 0, %s154
      %s174 = sphi 0, %s176
      %s177 = sphi 0, %s174
      %s178 = sphi 0, %s177
      %s194 = sphi 0, %s178
      %s200 = sphi 0, %s202
      %s203 = sphi 0, %s200
      %s204 = sphi 0, %s203
      %s220 = sphi 0, %s204
    $region4: #{tpu_custom_call.1} parent=1 // loop_header_branch
      %26 = sbr.rel (%p24) target = $region8
    $region5: #{tpu_custom_call.1} parent=1 // loop_body
      %s28 = ssub.s32 %s23, 1
      %s29 = ssub.s32 %s23, 2
      %s30 = sadd.s32 %s23, 1
      %s31 = ssub.s32 %s23, %s30
      %p32 = scmp.eq.s32.totalorder %s31, 0
      %s34 = sadd.s32 %s33, 1
      %s35 = scalar_select %p32, %s33, %s34
      %p38 = pneg %p32
      %p39 = scmp.eq.s32.totalorder %s23, 1
      %p40 = por %p38, %p39
      %p41 = scmp.ne.s32.totalorder %s33, %s36
      %p42 = scmp.eq.s32.totalorder %s23, 0
      %p43 = por %p41, %p42
      %p44 = scmp.ne.s32.totalorder %s33, %s36
      %p45 = scmp.eq.s32.totalorder %s28, 1
      %p46 = por %p44, %p45
      %p47 = scmp.ne.s32.totalorder %s36, %s37
      %p48 = scmp.eq.s32.totalorder %s28, 0
      %p49 = por %p47, %p48
      %p50 = scmp.ne.s32.totalorder %s36, %s37
      %p51 = scmp.eq.s32.totalorder %s29, 1
      %p52 = por %p50, %p51
      %p54 = scmp.ne.s32.totalorder %s37, %s53
      %p55 = scmp.eq.s32.totalorder %s29, 0
      %p56 = por %p54, %p55
      %s57 = ssub.s32 %s23, %s30
      %p58 = scmp.eq.s32.totalorder %s57, 0
      %s60 = sadd.s32 %s59, 1
      %s61 = scalar_select %p58, %s59, %s60
      %p64 = pneg %p58
      %p65 = scmp.eq.s32.totalorder %s23, 1
      %p66 = por %p64, %p65
      %p67 = scmp.ne.s32.totalorder %s59, %s62
      %p68 = scmp.eq.s32.totalorder %s23, 0
      %p69 = por %p67, %p68
      %p70 = scmp.ne.s32.totalorder %s59, %s62
      %p71 = scmp.eq.s32.totalorder %s28, 1
      %p72 = por %p70, %p71
      %p73 = scmp.ne.s32.totalorder %s62, %s63
      %p74 = scmp.eq.s32.totalorder %s28, 0
      %p75 = por %p73, %p74
      %p76 = scmp.ne.s32.totalorder %s62, %s63
      %p77 = scmp.eq.s32.totalorder %s29, 1
      %p78 = por %p76, %p77
      %p80 = scmp.ne.s32.totalorder %s63, %s79
      %p81 = scmp.eq.s32.totalorder %s29, 0
      %p82 = por %p80, %p81
      %s83 = ssub.s32 %s23, %s30
      %p84 = scmp.eq.s32.totalorder %s83, 0
      %s86 = sadd.s32 %s85, 1
      %s87 = scalar_select %p84, %s85, %s86
      %p90 = pneg %p84
      %p91 = scmp.eq.s32.totalorder %s23, 1
      %p92 = por %p90, %p91
      %p93 = scmp.ne.s32.totalorder %s85, %s88
      %p94 = scmp.eq.s32.totalorder %s23, 0
      %p95 = por %p93, %p94
      %p96 = scmp.ne.s32.totalorder %s85, %s88
      %p97 = scmp.eq.s32.totalorder %s28, 1
      %p98 = por %p96, %p97
      %p99 = scmp.ne.s32.totalorder %s88, %s89
      %p100 = scmp.eq.s32.totalorder %s28, 0
      %p101 = por %p99, %p100
      %p102 = scmp.ne.s32.totalorder %s88, %s89
      %p103 = scmp.eq.s32.totalorder %s29, 1
      %p104 = por %p102, %p103
      %p106 = scmp.ne.s32.totalorder %s89, %s105
      %p107 = scmp.eq.s32.totalorder %s29, 0
      %p108 = por %p106, %p107
      %s110 = sadd.s32 %s109, 1
      %p113 = scmp.eq.s32.totalorder %s23, 1
      %p114 = scmp.ne.s32.totalorder %s109, %s111
      %p115 = scmp.eq.s32.totalorder %s23, 0
      %p116 = por %p114, %p115
      %p117 = scmp.ne.s32.totalorder %s109, %s111
      %p118 = scmp.eq.s32.totalorder %s28, 1
      %p119 = por %p117, %p118
      %p120 = scmp.ne.s32.totalorder %s111, %s112
      %p121 = scmp.eq.s32.totalorder %s28, 0
      %p122 = por %p120, %p121
      %p123 = scmp.ne.s32.totalorder %s111, %s112
      %p124 = scmp.eq.s32.totalorder %s29, 1
      %p125 = por %p123, %p124
      %p127 = scmp.ne.s32.totalorder %s112, %s126
      %p128 = scmp.eq.s32.totalorder %s29, 0
      %p129 = por %p127, %p128
      %s131 = sadd.s32 %s130, 1
      %p134 = scmp.eq.s32.totalorder %s23, 1
      %p135 = scmp.ne.s32.totalorder %s130, %s132
      %p136 = scmp.eq.s32.totalorder %s23, 0
      %p137 = por %p135, %p136
      %p138 = scmp.ne.s32.totalorder %s130, %s132
      %p139 = scmp.eq.s32.totalorder %s28, 1
      %p140 = por %p138, %p139
      %p141 = scmp.ne.s32.totalorder %s132, %s133
      %p142 = scmp.eq.s32.totalorder %s28, 0
      %p143 = por %p141, %p142
      %p144 = scmp.ne.s32.totalorder %s132, %s133
      %p145 = scmp.eq.s32.totalorder %s29, 1
      %p146 = por %p144, %p145
      %p148 = scmp.ne.s32.totalorder %s133, %s147
      %p149 = scmp.eq.s32.totalorder %s29, 0
      %p150 = por %p148, %p149
      %s152 = sadd.s32 %s151, 1
      %p155 = scmp.eq.s32.totalorder %s23, 1
      %p156 = scmp.ne.s32.totalorder %s151, %s153
      %p157 = scmp.eq.s32.totalorder %s23, 0
      %p158 = por %p156, %p157
      %p159 = scmp.ne.s32.totalorder %s151, %s153
      %p160 = scmp.eq.s32.totalorder %s28, 1
      %p161 = por %p159, %p160
      %p162 = scmp.ne.s32.totalorder %s153, %s154
      %p163 = scmp.eq.s32.totalorder %s28, 0
      %p164 = por %p162, %p163
      %p165 = scmp.ne.s32.totalorder %s153, %s154
      %p166 = scmp.eq.s32.totalorder %s29, 1
      %p167 = por %p165, %p166
      %p169 = scmp.ne.s32.totalorder %s154, %s168
      %p170 = scmp.eq.s32.totalorder %s29, 0
      %p171 = por %p169, %p170
      %s172 = ssub.s32 %s23, %s30
      %p173 = scmp.eq.s32.totalorder %s172, 0
      %s175 = sadd.s32 %s174, 1
      %s176 = scalar_select %p173, %s174, %s175
      %p179 = pneg %p173
      %p180 = scmp.eq.s32.totalorder %s23, 1
      %p181 = por %p179, %p180
      %p182 = scmp.ne.s32.totalorder %s174, %s177
      %p183 = scmp.eq.s32.totalorder %s23, 0
      %p184 = por %p182, %p183
      %p185 = scmp.ne.s32.totalorder %s174, %s177
      %p186 = scmp.eq.s32.totalorder %s28, 1
      %p187 = por %p185, %p186
      %p188 = scmp.ne.s32.totalorder %s177, %s178
      %p189 = scmp.eq.s32.totalorder %s28, 0
      %p190 = por %p188, %p189
      %p191 = scmp.ne.s32.totalorder %s177, %s178
      %p192 = scmp.eq.s32.totalorder %s29, 1
      %p193 = por %p191, %p192
      %p195 = scmp.ne.s32.totalorder %s178, %s194
      %p196 = scmp.eq.s32.totalorder %s29, 0
      %p197 = por %p195, %p196
      %s198 = ssub.s32 %s23, %s30
      %p199 = scmp.eq.s32.totalorder %s198, 0
      %s201 = sadd.s32 %s200, 1
      %s202 = scalar_select %p199, %s200, %s201
      %p205 = pneg %p199
      %p206 = scmp.eq.s32.totalorder %s23, 1
      %p207 = por %p205, %p206
      %p208 = scmp.ne.s32.totalorder %s200, %s203
      %p209 = scmp.eq.s32.totalorder %s23, 0
      %p210 = por %p208, %p209
      %p211 = scmp.ne.s32.totalorder %s200, %s203
      %p212 = scmp.eq.s32.totalorder %s28, 1
      %p213 = por %p211, %p212
      %p214 = scmp.ne.s32.totalorder %s203, %s204
      %p215 = scmp.eq.s32.totalorder %s28, 0
      %p216 = por %p214, %p215
      %p217 = scmp.ne.s32.totalorder %s203, %s204
      %p218 = scmp.eq.s32.totalorder %s29, 1
      %p219 = por %p217, %p218
      %p221 = scmp.ne.s32.totalorder %s204, %s220
      %p222 = scmp.eq.s32.totalorder %s29, 0
      %p223 = por %p221, %p222
      %p224 = scmp.le.s32.totalorder 1, %s23
      %p225 = scmp.lt.s32.totalorder %s23, 3
      %p226 = pnand %p224, %p225
      %p227 = pneg %p226
      // Predicated region
      $region9: #{tpu_custom_call.1} parent=5 // pred_check
        _
      $region10: #{tpu_custom_call.1} parent=5 // pred_check_branch
        %229 = sbr.rel (%p226) target = $region12
      $region11: #{tpu_custom_call.1} parent=5 // pred_region
        %s230 = ssub.s32 %s23, 1
        // Predicated region
        $region13: #{tpu_custom_call.1} parent=11 // pred_check
          %p231 = pneg %p122
        $region14: #{tpu_custom_call.1} parent=11 // pred_check_branch
          %233 = sbr.rel (%p231) target = $region16
        $region15: #{tpu_custom_call.1} parent=11 // pred_region
          %s235 = ssub.s32 64, 64
          %236 = vsyncadd [#allocation9], %s235
          %s238 = sshll.u32 [#allocation8], 4
          %s239 = int_to_ptr.vmem [resolvable:$true] %s238
          %241 = dma.hbm_to_vmem [thread:$0]  %s3, 64, %s239, [#allocation9]
        $region16: #{tpu_custom_call.1} parent=11 // pred_fallthru
          _
        // Predicated region
        $region17: #{tpu_custom_call.1} parent=11 // pred_check
          %p242 = pneg %p143
        $region18: #{tpu_custom_call.1} parent=11 // pred_check_branch
          %244 = sbr.rel (%p242) target = $region20
        $region19: #{tpu_custom_call.1} parent=11 // pred_region
          %s246 = ssub.s32 256, 256
          %247 = vsyncadd [#allocation9], %s246
          %s249 = sshll.u32 [#allocation10], 4
          %s250 = int_to_ptr.vmem [resolvable:$true] %s249
          %252 = dma.hbm_to_vmem [thread:$0]  %s4, 256, %s250, [#allocation9]
        $region20: #{tpu_custom_call.1} parent=11 // pred_fallthru
          _
        // Predicated region
        $region21: #{tpu_custom_call.1} parent=11 // pred_check
          %p253 = pneg %p164
        $region22: #{tpu_custom_call.1} parent=11 // pred_check_branch
          %255 = sbr.rel (%p253) target = $region24
        $region23: #{tpu_custom_call.1} parent=11 // pred_region
          _
        $region24: #{tpu_custom_call.1} parent=11 // pred_fallthru
          _
      $region12: #{tpu_custom_call.1} parent=5 // pred_fallthru
        _
      %p256 = scmp.lt.s32.totalorder %s23, 2
      // Predicated region
      $region25: #{tpu_custom_call.1} parent=5 // pred_check
        %p257 = pneg %p256
      $region26: #{tpu_custom_call.1} parent=5 // pred_check_branch
        %259 = sbr.rel (%p257) target = $region28
      $region27: #{tpu_custom_call.1} parent=5 // pred_region
        // Predicated region
        $region29: #{tpu_custom_call.1} parent=27 // pred_check
          %p260 = pneg %p43
        $region30: #{tpu_custom_call.1} parent=27 // pred_check_branch
          %262 = sbr.rel (%p260) target = $region32
        $region31: #{tpu_custom_call.1} parent=27 // pred_region
          %s263 = sand.u32 %s33, 1
          %s264 = scalar_lea.sflag [#allocation3], %s263
          %s265 = sand.u32 %s33, 1
          %s266 = smul.addr %s265, 8
          %s267 = scalar_lea.vmem [#allocation2], %s266
          %s269 = ssub.s32 128, 128
          %270 = vsyncadd %s264, %s269
          %s271 = smul.addr %s23, 128
          %s272 = scalar_lea.hbm %s0, %s271
          %s274 = sshll.u32 %s267, 4
          %s275 = int_to_ptr.vmem [resolvable:$true] %s274
          %277 = dma.hbm_to_vmem [thread:$0]  %s272, 128, %s275, %s264
        $region32: #{tpu_custom_call.1} parent=27 // pred_fallthru
          _
        // Predicated region
        $region33: #{tpu_custom_call.1} parent=27 // pred_check
          %p278 = pneg %p69
        $region34: #{tpu_custom_call.1} parent=27 // pred_check_branch
          %280 = sbr.rel (%p278) target = $region36
        $region35: #{tpu_custom_call.1} parent=27 // pred_region
          %s281 = sand.u32 %s23, 1
          %s282 = scalar_lea.sflag [#allocation6], %s281
          %s283 = sand.u32 %s59, 1
          %s284 = smul.addr %s283, 4
          %s285 = scalar_lea.vmem [#allocation5], %s284
          %s287 = ssub.s32 64, 64
          %288 = vsyncadd %s282, %s287
          %s289 = smul.addr %s23, 4
          %s290 = smul.addr %s289, 16
          %s291 = scalar_lea.hbm %s1, %s290
          %s293 = sshll.u32 %s285, 4
          %s294 = int_to_ptr.vmem [resolvable:$true] %s293
          %296 = dma.hbm_to_vmem [thread:$0]  %s291, 64, %s294, %s282
        $region36: #{tpu_custom_call.1} parent=27 // pred_fallthru
          _
        // Predicated region
        $region37: #{tpu_custom_call.1} parent=27 // pred_check
          %p297 = pneg %p95
        $region38: #{tpu_custom_call.1} parent=27 // pred_check_branch
          %299 = sbr.rel (%p297) target = $region40
        $region39: #{tpu_custom_call.1} parent=27 // pred_region
          %s300 = sand.u32 %s23, 1
          %s301 = scalar_lea.sflag [#allocation6], %s300
          %s302 = sand.u32 %s85, 1
          %s303 = smul.addr %s302, 4
          %s304 = scalar_lea.vmem [#allocation7], %s303
          %s306 = ssub.s32 64, 64
          %307 = vsyncadd %s301, %s306
          %s308 = smul.addr %s23, 4
          %s309 = smul.addr %s308, 16
          %s310 = scalar_lea.hbm %s2, %s309
          %s312 = sshll.u32 %s304, 4
          %s313 = int_to_ptr.vmem [resolvable:$true] %s312
          %315 = dma.hbm_to_vmem [thread:$0]  %s310, 64, %s313, %s301
        $region40: #{tpu_custom_call.1} parent=27 // pred_fallthru
          _
        // Predicated region
        $region41: #{tpu_custom_call.1} parent=27 // pred_check
          %p316 = pneg %p184
        $region42: #{tpu_custom_call.1} parent=27 // pred_check_branch
          %318 = sbr.rel (%p316) target = $region44
        $region43: #{tpu_custom_call.1} parent=27 // pred_region
          %p319 = scmp.lt.s32.totalorder %s23, 1
          %s320 = scalar_select %p319, %s23, 1
          %s321 = scalar_lea.vmem %s6, %s320
        $region44: #{tpu_custom_call.1} parent=27 // pred_fallthru
          _
      $region28: #{tpu_custom_call.1} parent=5 // pred_fallthru
        _
      %p322 = scmp.le.s32.totalorder 1, %s23
      %p323 = scmp.lt.s32.totalorder %s23, 3
      %p324 = pnand %p322, %p323
      %p325 = pneg %p324
      // Predicated region
      $region45: #{tpu_custom_call.1} parent=5 // pred_check
        _
      $region46: #{tpu_custom_call.1} parent=5 // pred_check_branch
        %327 = sbr.rel (%p324) target = $region48
      $region47: #{tpu_custom_call.1} parent=5 // pred_region
        %s328 = ssub.s32 %s23, 1
        %s329 = sand.u32 %s36, 1
        %s330 = scalar_lea.sflag [#allocation3], %s329
        %s331 = sand.u32 %s36, 1
        %s332 = smul.addr %s331, 8
        %s333 = scalar_lea.vmem [#allocation2], %s332
        // Predicated region
        $region49: #{tpu_custom_call.1} parent=47 // pred_check
          %p334 = pneg %p49
        $region50: #{tpu_custom_call.1} parent=47 // pred_check_branch
          %336 = sbr.rel (%p334) target = $region52
        $region51: #{tpu_custom_call.1} parent=47 // pred_region
          %337 = dma.done %s330, 128
        $region52: #{tpu_custom_call.1} parent=47 // pred_fallthru
          _
        %s338 = sand.u32 %s28, 1
        %s339 = scalar_lea.sflag [#allocation6], %s338
        %s340 = sand.u32 %s62, 1
        %s341 = smul.addr %s340, 4
        %s342 = scalar_lea.vmem [#allocation5], %s341
        // Predicated region
        $region53: #{tpu_custom_call.1} parent=47 // pred_check
          %p343 = pneg %p75
        $region54: #{tpu_custom_call.1} parent=47 // pred_check_branch
          %345 = sbr.rel (%p343) target = $region56
        $region55: #{tpu_custom_call.1} parent=47 // pred_region
          %346 = dma.done %s339, 64
        $region56: #{tpu_custom_call.1} parent=47 // pred_fallthru
          _
        %s347 = sand.u32 %s28, 1
        %s348 = scalar_lea.sflag [#allocation6], %s347
        %s349 = sand.u32 %s88, 1
        %s350 = smul.addr %s349, 4
        %s351 = scalar_lea.vmem [#allocation7], %s350
        // Predicated region
        $region57: #{tpu_custom_call.1} parent=47 // pred_check
          %p352 = pneg %p101
        $region58: #{tpu_custom_call.1} parent=47 // pred_check_branch
          %354 = sbr.rel (%p352) target = $region60
        $region59: #{tpu_custom_call.1} parent=47 // pred_region
          %355 = dma.done %s348, 64
        $region60: #{tpu_custom_call.1} parent=47 // pred_fallthru
          _
        // Predicated region
        $region61: #{tpu_custom_call.1} parent=47 // pred_check
          %p356 = pneg %p122
        $region62: #{tpu_custom_call.1} parent=47 // pred_check_branch
          %358 = sbr.rel (%p356) target = $region64
        $region63: #{tpu_custom_call.1} parent=47 // pred_region
          %359 = dma.done [#allocation9], 64
        $region64: #{tpu_custom_call.1} parent=47 // pred_fallthru
          _
        // Predicated region
        $region65: #{tpu_custom_call.1} parent=47 // pred_check
          %p360 = pneg %p143
        $region66: #{tpu_custom_call.1} parent=47 // pred_check_branch
          %362 = sbr.rel (%p360) target = $region68
        $region67: #{tpu_custom_call.1} parent=47 // pred_region
          %363 = dma.done [#allocation9], 256
        $region68: #{tpu_custom_call.1} parent=47 // pred_fallthru
          _
        %s364 = sand.u32 %s36, 1
        %s365 = scalar_lea.sflag [#allocation3], %s364
        %s366 = sand.u32 %s36, 1
        %s367 = smul.addr %s366, 8
        %s368 = scalar_lea.vmem [#allocation2], %s367
        %p369 = pneg %p49
        %p370 = pneg %p46
        %s371 = sand.u32 %s28, 1
        %s372 = scalar_lea.sflag [#allocation6], %s371
        %s373 = sand.u32 %s62, 1
        %s374 = smul.addr %s373, 4
        %s375 = scalar_lea.vmem [#allocation5], %s374
        %p376 = pneg %p75
        %p377 = pneg %p72
        %s378 = sand.u32 %s28, 1
        %s379 = scalar_lea.sflag [#allocation6], %s378
        %s380 = sand.u32 %s88, 1
        %s381 = smul.addr %s380, 4
        %s382 = scalar_lea.vmem [#allocation7], %s381
        %p383 = pneg %p101
        %p384 = pneg %p98
        %p385 = pneg %p122
        %p386 = pneg %p119
        %p387 = pneg %p143
        %p388 = pneg %p140
        %p389 = pneg %p164
        %p390 = pneg %p161
        %p391 = scmp.lt.s32.totalorder %s28, 1
        %s392 = scalar_select %p391, %s28, 1
        %s393 = scalar_lea.vmem %s6, %s392
        %p394 = pneg %p190
        %p395 = pneg %p187
        %p396 = pneg %p216
        %p397 = pneg %p213
        %s398 = sand.u32 %s203, 1
        %s399 = scalar_lea.sflag [#allocation4], %s398
        %s400 = sand.u32 %s203, 1
        %s401 = smul.addr %s400, 8
        %s402 = scalar_lea.vmem [#allocation11], %s401
        %p403 = scmp.lt.s32.totalorder %s28, 1
        %s404 = scalar_select %p403, %s28, 1
        %s405 = scalar_lea.vmem %s6, %s404
        %v407 = vld [vmem:[%s333] sm:$0xff]
        %v408 = vpack.c.bf16 %v407, %v407
        %v409 = vld [vmem:[#allocation8] sm:$0xf]
        %v410 = vlaneseq
        %v411 = vshrl.u32 %v410, 7
        %v412 = vadd.s32 %v411, 8
        %v413 = vadd.s32 %v411, 16
        %v414 = vadd.s32 %v411, 24
        %v415 = vadd.s32 %v411, 32
        %v416 = vadd.s32 %v411, 40
        %v417 = vadd.s32 %v411, 48
        %v418 = vadd.s32 %v411, 56
        %v419 = vadd.s32 %v411, 64
        %v420 = vadd.s32 %v411, 72
        %v421 = vadd.s32 %v411, 80
        %v422 = vadd.s32 %v411, 88
        %v423 = vadd.s32 %v411, 96
        %v424 = vadd.s32 %v411, 104
        %v425 = vadd.s32 %v411, 112
        %v426 = vadd.s32 %v411, 120
        %v427 = vlaneseq
        %v428 = vand.u32 %v427, 127
        %vm429 = vcmp.lt.s32.totalorder %v428, 16
        %v430 = vsel %vm429, 1, 0
        %v431 = vcvt.s32.f32 %v430
        %v432 = vld [vmem:[%s342] sm:$0x1]
        %v433 = vlaneseq
        %v434 = vshrl.u32 %v433, 7
        %v435 = vsub.s32 0, %v434
        %v436 = vrot.slane %v432, %v435
        %vm437 = vcmp.eq.s32.totalorder %v411, %v436
        %vm438 = vcmp.eq.s32.totalorder %v412, %v436
        %vm439 = vcmp.eq.s32.totalorder %v413, %v436
        %vm440 = vcmp.eq.s32.totalorder %v414, %v436
        %vm441 = vcmp.eq.s32.totalorder %v415, %v436
        %vm442 = vcmp.eq.s32.totalorder %v416, %v436
        %vm443 = vcmp.eq.s32.totalorder %v417, %v436
        %vm444 = vcmp.eq.s32.totalorder %v418, %v436
        %vm445 = vcmp.eq.s32.totalorder %v419, %v436
        %vm446 = vcmp.eq.s32.totalorder %v420, %v436
        %vm447 = vcmp.eq.s32.totalorder %v421, %v436
        %vm448 = vcmp.eq.s32.totalorder %v422, %v436
        %vm449 = vcmp.eq.s32.totalorder %v423, %v436
        %vm450 = vcmp.eq.s32.totalorder %v424, %v436
        %vm451 = vcmp.eq.s32.totalorder %v425, %v436
        %vm452 = vcmp.eq.s32.totalorder %v426, %v436
        %v453 = vsel %vm437, 1.0, 0.0
        %v454 = vsel %vm438, 1.0, 0.0
        %v455 = vsel %vm439, 1.0, 0.0
        %v456 = vsel %vm440, 1.0, 0.0
        %v457 = vsel %vm441, 1.0, 0.0
        %v458 = vsel %vm442, 1.0, 0.0
        %v459 = vsel %vm443, 1.0, 0.0
        %v460 = vsel %vm444, 1.0, 0.0
        %v461 = vsel %vm445, 1.0, 0.0
        %v462 = vsel %vm446, 1.0, 0.0
        %v463 = vsel %vm447, 1.0, 0.0
        %v464 = vsel %vm448, 1.0, 0.0
        %v465 = vsel %vm449, 1.0, 0.0
        %v466 = vsel %vm450, 1.0, 0.0
        %v467 = vsel %vm451, 1.0, 0.0
        %v468 = vsel %vm452, 1.0, 0.0
        %v469 = vpack.c.bf16 %v454, %v453
        %v470 = vpack.c.bf16 %v456, %v455
        %v471 = vpack.c.bf16 %v458, %v457
        %v472 = vpack.c.bf16 %v460, %v459
        %v473 = vpack.c.bf16 %v462, %v461
        %v474 = vpack.c.bf16 %v464, %v463
        %v475 = vpack.c.bf16 %v466, %v465
        %v476 = vpack.c.bf16 %v468, %v467
        %477 = vmatprep.subr.bf16.mxu0 0
        %478 = vmatpush1.bf16.msra.mxu0 %v469
        %479 = vmatprep.subr.bf16.mxu0 0
        %480 = vmatpush1.bf16.msra.mxu0 %v470
        %481 = vmatprep.subr.bf16.mxu0 0
        %482 = vmatpush1.bf16.msra.mxu0 %v471
        %483 = vmatprep.subr.bf16.mxu0 0
        %484 = vmatpush1.bf16.msra.mxu0 %v472
        %485 = vmatprep.subr.bf16.mxu0 0
        %486 = vmatpush1.bf16.msra.mxu0 %v473
        %487 = vmatprep.subr.bf16.mxu0 0
        %488 = vmatpush1.bf16.msra.mxu0 %v474
        %489 = vmatprep.subr.bf16.mxu0 0
        %490 = vmatpush1.bf16.msra.mxu0 %v475
        %491 = vmatprep.subr.bf16.mxu0 0
        %492 = vmatpush1.bf16.msra.mxu0 %v476
        %493 = vmatprep.subr.bf16.mxu0 0
        %494 = vmatpush1.bf16.msra.mxu0 0
        %495 = vmatprep.subr.bf16.mxu0 0
        %496 = vmatpush1.bf16.msra.mxu0 0
        %497 = vmatprep.subr.bf16.mxu0 0
        %498 = vmatpush1.bf16.msra.mxu0 0
        %499 = vmatprep.subr.bf16.mxu0 0
        %500 = vmatpush1.bf16.msra.mxu0 0
        %501 = vmatprep.subr.bf16.mxu0 0
        %502 = vmatpush1.bf16.msra.mxu0 0
        %503 = vmatprep.subr.bf16.mxu0 0
        %504 = vmatpush1.bf16.msra.mxu0 0
        %505 = vmatprep.subr.bf16.mxu0 0
        %506 = vmatpush1.bf16.msra.mxu0 0
        %507 = vmatprep.subr.bf16.mxu0 0
        %508 = vmatpush1.bf16.msra.mxu0 0
        %509 = vmatprep.mubr.bf16.mxu0 0
        %510 = vmatmul.mubr.bf16.gmra.mrb[0].mxu0 %v408
        %v511 = vpop.f32.mrb[0].mxu0
        %v512 = vadd.f32 0.0, %v511
        %v513 = vpop.f32.mrb[0].mxu0
        %v514 = vpop.f32.mrb[0].mxu0
        %v515 = vpop.f32.mrb[0].mxu0
        %516 = vdwg.mxu0
        %v517 = vld [vmem:[%s351] sm:$0x1]
        %v518 = vsub.f32 %v512, %v407
        %v520 = vlaneseq
        %v521 = vshrl.u32 %v520, 7
        %v522 = vsub.s32 0, %v521
        %v523 = vrot.slane %v517, %v522
        %v525 = vmul.f32 %v523, %v518
        %v526 = vadd.f32 %v407, %v525
        %v527 = vpack.c.bf16 %v526, %v526
        %vm528 = vcmask 64512
        %v530 = vsel %vm528, %v409, 0
        %vm532 = vcmask 1043456
        %v534 = vsel %vm532, %v527, 0
        %536 = vmatprep.subr.bf16.mxu0 0
        %537 = vmatpush1.bf16.msra.mxu0 %v534
        %538 = vmatprep.subr.bf16.mxu0 0
        %539 = vmatpush1.bf16.msra.mxu0 0
        %540 = vmatprep.subr.bf16.mxu0 0
        %541 = vmatpush1.bf16.msra.mxu0 0
        %542 = vmatprep.subr.bf16.mxu0 0
        %543 = vmatpush1.bf16.msra.mxu0 0
        %544 = vmatprep.subr.bf16.mxu0 0
        %545 = vmatpush1.bf16.msra.mxu0 0
        %546 = vmatprep.subr.bf16.mxu0 0
        %547 = vmatpush1.bf16.msra.mxu0 0
        %548 = vmatprep.subr.bf16.mxu0 0
        %549 = vmatpush1.bf16.msra.mxu0 0
        %550 = vmatprep.subr.bf16.mxu0 0
        %551 = vmatpush1.bf16.msra.mxu0 0
        %552 = vmatprep.subr.bf16.mxu0 0
        %553 = vmatpush1.bf16.msra.mxu0 0
        %554 = vmatprep.subr.bf16.mxu0 0
        %555 = vmatpush1.bf16.msra.mxu0 0
        %556 = vmatprep.subr.bf16.mxu0 0
        %557 = vmatpush1.bf16.msra.mxu0 0
        %558 = vmatprep.subr.bf16.mxu0 0
        %559 = vmatpush1.bf16.msra.mxu0 0
        %560 = vmatprep.subr.bf16.mxu0 0
        %561 = vmatpush1.bf16.msra.mxu0 0
        %562 = vmatprep.subr.bf16.mxu0 0
        %563 = vmatpush1.bf16.msra.mxu0 0
        %564 = vmatprep.subr.bf16.mxu0 0
        %565 = vmatpush1.bf16.msra.mxu0 0
        %566 = vmatprep.subr.bf16.mxu0 0
        %567 = vmatpush1.bf16.msra.mxu0 0
        %568 = vmatprep.mubr.bf16.mxu0 0
        %569 = vmatmul.mubr.bf16.gmra.mrb[0].mxu0 %v530
        %v570 = vpop.f32.mrb[0].mxu0
        %v571 = vadd.f32 0.0, %v570
        %v572 = vpop.f32.mrb[0].mxu0
        %v573 = vpop.f32.mrb[0].mxu0
        %v574 = vpop.f32.mrb[0].mxu0
        %575 = vdwg.mxu0
        %v576 = vmul.f32 %v571, %v431
        %577 = vadd.xlane.f32.xlu0 %v576
        %v578 = vpop.xlane.xlu0 %577
        %v579 = vrot.slane %v578, 4
        %v580 = vadd.f32 %v578, %v579
        %v581 = vrot.slane %v580, 2
        %v582 = vadd.f32 %v580, %v581
        %v583 = vrot.slane %v582, 1
        %v584 = vadd.f32 %v582, %v583
        %s585 = vtos %v584
        %s586 = sadd.f32 %s585, 0.0
        %v587 = vld [vmem:[%s342 + $0x1] sm:$0x1]
        %v588 = vlaneseq
        %v589 = vshrl.u32 %v588, 7
        %v590 = vsub.s32 0, %v589
        %v591 = vrot.slane %v587, %v590
        %vm592 = vcmp.eq.s32.totalorder %v411, %v591
        %vm593 = vcmp.eq.s32.totalorder %v412, %v591
        %vm594 = vcmp.eq.s32.totalorder %v413, %v591
        %vm595 = vcmp.eq.s32.totalorder %v414, %v591
        %vm596 = vcmp.eq.s32.totalorder %v415, %v591
        %vm597 = vcmp.eq.s32.totalorder %v416, %v591
        %vm598 = vcmp.eq.s32.totalorder %v417, %v591
        %vm599 = vcmp.eq.s32.totalorder %v418, %v591
        %vm600 = vcmp.eq.s32.totalorder %v419, %v591
        %vm601 = vcmp.eq.s32.totalorder %v420, %v591
        %vm602 = vcmp.eq.s32.totalorder %v421, %v591
        %vm603 = vcmp.eq.s32.totalorder %v422, %v591
        %vm604 = vcmp.eq.s32.totalorder %v423, %v591
        %vm605 = vcmp.eq.s32.totalorder %v424, %v591
        %vm606 = vcmp.eq.s32.totalorder %v425, %v591
        %vm607 = vcmp.eq.s32.totalorder %v426, %v591
        %v608 = vsel %vm592, 1.0, 0.0
        %v609 = vsel %vm593, 1.0, 0.0
        %v610 = vsel %vm594, 1.0, 0.0
        %v611 = vsel %vm595, 1.0, 0.0
        %v612 = vsel %vm596, 1.0, 0.0
        %v613 = vsel %vm597, 1.0, 0.0
        %v614 = vsel %vm598, 1.0, 0.0
        %v615 = vsel %vm599, 1.0, 0.0
        %v616 = vsel %vm600, 1.0, 0.0
        %v617 = vsel %vm601, 1.0, 0.0
        %v618 = vsel %vm602, 1.0, 0.0
        %v619 = vsel %vm603, 1.0, 0.0
        %v620 = vsel %vm604, 1.0, 0.0
        %v621 = vsel %vm605, 1.0, 0.0
        %v622 = vsel %vm606, 1.0, 0.0
        %v623 = vsel %vm607, 1.0, 0.0
        %v624 = vpack.c.bf16 %v609, %v608
        %v625 = vpack.c.bf16 %v611, %v610
        %v626 = vpack.c.bf16 %v613, %v612
        %v627 = vpack.c.bf16 %v615, %v614
        %v628 = vpack.c.bf16 %v617, %v616
        %v629 = vpack.c.bf16 %v619, %v618
        %v630 = vpack.c.bf16 %v621, %v620
        %v631 = vpack.c.bf16 %v623, %v622
        %632 = vmatprep.subr.bf16.mxu0 0
        %633 = vmatpush1.bf16.msra.mxu0 %v624
        %634 = vmatprep.subr.bf16.mxu0 0
        %635 = vmatpush1.bf16.msra.mxu0 %v625
        %636 = vmatprep.subr.bf16.mxu0 0
        %637 = vmatpush1.bf16.msra.mxu0 %v626
        %638 = vmatprep.subr.bf16.mxu0 0
        %639 = vmatpush1.bf16.msra.mxu0 %v627
        %640 = vmatprep.subr.bf16.mxu0 0
        %641 = vmatpush1.bf16.msra.mxu0 %v628
        %642 = vmatprep.subr.bf16.mxu0 0
        %643 = vmatpush1.bf16.msra.mxu0 %v629
        %644 = vmatprep.subr.bf16.mxu0 0
        %645 = vmatpush1.bf16.msra.mxu0 %v630
        %646 = vmatprep.subr.bf16.mxu0 0
        %647 = vmatpush1.bf16.msra.mxu0 %v631
        %648 = vmatprep.subr.bf16.mxu0 0
        %649 = vmatpush1.bf16.msra.mxu0 0
        %650 = vmatprep.subr.bf16.mxu0 0
        %651 = vmatpush1.bf16.msra.mxu0 0
        %652 = vmatprep.subr.bf16.mxu0 0
        %653 = vmatpush1.bf16.msra.mxu0 0
        %654 = vmatprep.subr.bf16.mxu0 0
        %655 = vmatpush1.bf16.msra.mxu0 0
        %656 = vmatprep.subr.bf16.mxu0 0
        %657 = vmatpush1.bf16.msra.mxu0 0
        %658 = vmatprep.subr.bf16.mxu0 0
        %659 = vmatpush1.bf16.msra.mxu0 0
        %660 = vmatprep.subr.bf16.mxu0 0
        %661 = vmatpush1.bf16.msra.mxu0 0
        %662 = vmatprep.subr.bf16.mxu0 0
        %663 = vmatpush1.bf16.msra.mxu0 0
        %664 = vmatprep.mubr.bf16.mxu0 0
        %665 = vmatmul.mubr.bf16.gmra.mrb[0].mxu0 %v408
        %v666 = vpop.f32.mrb[0].mxu0
        %v667 = vadd.f32 0.0, %v666
        %v668 = vpop.f32.mrb[0].mxu0
        %v669 = vpop.f32.mrb[0].mxu0
        %v670 = vpop.f32.mrb[0].mxu0
        %671 = vdwg.mxu0
        %v672 = vld [vmem:[%s351 + $0x1] sm:$0x1]
        %v673 = vsub.f32 %v667, %v407
        %v675 = vlaneseq
        %v676 = vshrl.u32 %v675, 7
        %v677 = vsub.s32 0, %v676
        %v678 = vrot.slane %v672, %v677
        %v680 = vmul.f32 %v678, %v673
        %v681 = vadd.f32 %v407, %v680
        %v682 = vpack.c.bf16 %v681, %v681
        %v684 = vsel %vm532, %v682, 0
        %686 = vmatprep.subr.bf16.mxu0 0
        %687 = vmatpush1.bf16.msra.mxu0 %v684
        %688 = vmatprep.subr.bf16.mxu0 0
        %689 = vmatpush1.bf16.msra.mxu0 0
        %690 = vmatprep.subr.bf16.mxu0 0
        %691 = vmatpush1.bf16.msra.mxu0 0
        %692 = vmatprep.subr.bf16.mxu0 0
        %693 = vmatpush1.bf16.msra.mxu0 0
        %694 = vmatprep.subr.bf16.mxu0 0
        %695 = vmatpush1.bf16.msra.mxu0 0
        %696 = vmatprep.subr.bf16.mxu0 0
        %697 = vmatpush1.bf16.msra.mxu0 0
        %698 = vmatprep.subr.bf16.mxu0 0
        %699 = vmatpush1.bf16.msra.mxu0 0
        %700 = vmatprep.subr.bf16.mxu0 0
        %701 = vmatpush1.bf16.msra.mxu0 0
        %702 = vmatprep.subr.bf16.mxu0 0
        %703 = vmatpush1.bf16.msra.mxu0 0
        %704 = vmatprep.subr.bf16.mxu0 0
        %705 = vmatpush1.bf16.msra.mxu0 0
        %706 = vmatprep.subr.bf16.mxu0 0
        %707 = vmatpush1.bf16.msra.mxu0 0
        %708 = vmatprep.subr.bf16.mxu0 0
        %709 = vmatpush1.bf16.msra.mxu0 0
        %710 = vmatprep.subr.bf16.mxu0 0
        %711 = vmatpush1.bf16.msra.mxu0 0
        %712 = vmatprep.subr.bf16.mxu0 0
        %713 = vmatpush1.bf16.msra.mxu0 0
        %714 = vmatprep.subr.bf16.mxu0 0
        %715 = vmatpush1.bf16.msra.mxu0 0
        %716 = vmatprep.subr.bf16.mxu0 0
        %717 = vmatpush1.bf16.msra.mxu0 0
        %718 = vmatprep.mubr.bf16.mxu0 0
        %719 = vmatmul.mubr.bf16.gmra.mrb[0].mxu0 %v530
        %v720 = vpop.f32.mrb[0].mxu0
        %v721 = vadd.f32 0.0, %v720
        %v722 = vpop.f32.mrb[0].mxu0
        %v723 = vpop.f32.mrb[0].mxu0
        %v724 = vpop.f32.mrb[0].mxu0
        %725 = vdwg.mxu0
        %v726 = vmul.f32 %v721, %v431
        %727 = vadd.xlane.f32.xlu0 %v726
        %v728 = vpop.xlane.xlu0 %727
        %v729 = vrot.slane %v728, 4
        %v730 = vadd.f32 %v728, %v729
        %v731 = vrot.slane %v730, 2
        %v732 = vadd.f32 %v730, %v731
        %v733 = vrot.slane %v732, 1
        %v734 = vadd.f32 %v732, %v733
        %s735 = vtos %v734
        %s736 = sadd.f32 %s586, %s735
        %v737 = vld [vmem:[%s342 + $0x2] sm:$0x1]
        %v738 = vlaneseq
        %v739 = vshrl.u32 %v738, 7
        %v740 = vsub.s32 0, %v739
        %v741 = vrot.slane %v737, %v740
        %vm742 = vcmp.eq.s32.totalorder %v411, %v741
        %vm743 = vcmp.eq.s32.totalorder %v412, %v741
        %vm744 = vcmp.eq.s32.totalorder %v413, %v741
        %vm745 = vcmp.eq.s32.totalorder %v414, %v741
        %vm746 = vcmp.eq.s32.totalorder %v415, %v741
        %vm747 = vcmp.eq.s32.totalorder %v416, %v741
        %vm748 = vcmp.eq.s32.totalorder %v417, %v741
        %vm749 = vcmp.eq.s32.totalorder %v418, %v741
        %vm750 = vcmp.eq.s32.totalorder %v419, %v741
        %vm751 = vcmp.eq.s32.totalorder %v420, %v741
        %vm752 = vcmp.eq.s32.totalorder %v421, %v741
        %vm753 = vcmp.eq.s32.totalorder %v422, %v741
        %vm754 = vcmp.eq.s32.totalorder %v423, %v741
        %vm755 = vcmp.eq.s32.totalorder %v424, %v741
        %vm756 = vcmp.eq.s32.totalorder %v425, %v741
        %vm757 = vcmp.eq.s32.totalorder %v426, %v741
        %v758 = vsel %vm742, 1.0, 0.0
        %v759 = vsel %vm743, 1.0, 0.0
        %v760 = vsel %vm744, 1.0, 0.0
        %v761 = vsel %vm745, 1.0, 0.0
        %v762 = vsel %vm746, 1.0, 0.0
        %v763 = vsel %vm747, 1.0, 0.0
        %v764 = vsel %vm748, 1.0, 0.0
        %v765 = vsel %vm749, 1.0, 0.0
        %v766 = vsel %vm750, 1.0, 0.0
        %v767 = vsel %vm751, 1.0, 0.0
        %v768 = vsel %vm752, 1.0, 0.0
        %v769 = vsel %vm753, 1.0, 0.0
        %v770 = vsel %vm754, 1.0, 0.0
        %v771 = vsel %vm755, 1.0, 0.0
        %v772 = vsel %vm756, 1.0, 0.0
        %v773 = vsel %vm757, 1.0, 0.0
        %v774 = vpack.c.bf16 %v759, %v758
        %v775 = vpack.c.bf16 %v761, %v760
        %v776 = vpack.c.bf16 %v763, %v762
        %v777 = vpack.c.bf16 %v765, %v764
        %v778 = vpack.c.bf16 %v767, %v766
        %v779 = vpack.c.bf16 %v769, %v768
        %v780 = vpack.c.bf16 %v771, %v770
        %v781 = vpack.c.bf16 %v773, %v772
        %782 = vmatprep.subr.bf16.mxu0 0
        %783 = vmatpush1.bf16.msra.mxu0 %v774
        %784 = vmatprep.subr.bf16.mxu0 0
        %785 = vmatpush1.bf16.msra.mxu0 %v775
        %786 = vmatprep.subr.bf16.mxu0 0
        %787 = vmatpush1.bf16.msra.mxu0 %v776
        %788 = vmatprep.subr.bf16.mxu0 0
        %789 = vmatpush1.bf16.msra.mxu0 %v777
        %790 = vmatprep.subr.bf16.mxu0 0
        %791 = vmatpush1.bf16.msra.mxu0 %v778
        %792 = vmatprep.subr.bf16.mxu0 0
        %793 = vmatpush1.bf16.msra.mxu0 %v779
        %794 = vmatprep.subr.bf16.mxu0 0
        %795 = vmatpush1.bf16.msra.mxu0 %v780
        %796 = vmatprep.subr.bf16.mxu0 0
        %797 = vmatpush1.bf16.msra.mxu0 %v781
        %798 = vmatprep.subr.bf16.mxu0 0
        %799 = vmatpush1.bf16.msra.mxu0 0
        %800 = vmatprep.subr.bf16.mxu0 0
        %801 = vmatpush1.bf16.msra.mxu0 0
        %802 = vmatprep.subr.bf16.mxu0 0
        %803 = vmatpush1.bf16.msra.mxu0 0
        %804 = vmatprep.subr.bf16.mxu0 0
        %805 = vmatpush1.bf16.msra.mxu0 0
        %806 = vmatprep.subr.bf16.mxu0 0
        %807 = vmatpush1.bf16.msra.mxu0 0
        %808 = vmatprep.subr.bf16.mxu0 0
        %809 = vmatpush1.bf16.msra.mxu0 0
        %810 = vmatprep.subr.bf16.mxu0 0
        %811 = vmatpush1.bf16.msra.mxu0 0
        %812 = vmatprep.subr.bf16.mxu0 0
        %813 = vmatpush1.bf16.msra.mxu0 0
        %814 = vmatprep.mubr.bf16.mxu0 0
        %815 = vmatmul.mubr.bf16.gmra.mrb[0].mxu0 %v408
        %v816 = vpop.f32.mrb[0].mxu0
        %v817 = vadd.f32 0.0, %v816
        %v818 = vpop.f32.mrb[0].mxu0
        %v819 = vpop.f32.mrb[0].mxu0
        %v820 = vpop.f32.mrb[0].mxu0
        %821 = vdwg.mxu0
        %v822 = vld [vmem:[%s351 + $0x2] sm:$0x1]
        %v823 = vsub.f32 %v817, %v407
        %v825 = vlaneseq
        %v826 = vshrl.u32 %v825, 7
        %v827 = vsub.s32 0, %v826
        %v828 = vrot.slane %v822, %v827
        %v830 = vmul.f32 %v828, %v823
        %v831 = vadd.f32 %v407, %v830
        %v832 = vpack.c.bf16 %v831, %v831
        %v834 = vsel %vm532, %v832, 0
        %836 = vmatprep.subr.bf16.mxu0 0
        %837 = vmatpush1.bf16.msra.mxu0 %v834
        %838 = vmatprep.subr.bf16.mxu0 0
        %839 = vmatpush1.bf16.msra.mxu0 0
        %840 = vmatprep.subr.bf16.mxu0 0
        %841 = vmatpush1.bf16.msra.mxu0 0
        %842 = vmatprep.subr.bf16.mxu0 0
        %843 = vmatpush1.bf16.msra.mxu0 0
        %844 = vmatprep.subr.bf16.mxu0 0
        %845 = vmatpush1.bf16.msra.mxu0 0
        %846 = vmatprep.subr.bf16.mxu0 0
        %847 = vmatpush1.bf16.msra.mxu0 0
        %848 = vmatprep.subr.bf16.mxu0 0
        %849 = vmatpush1.bf16.msra.mxu0 0
        %850 = vmatprep.subr.bf16.mxu0 0
        %851 = vmatpush1.bf16.msra.mxu0 0
        %852 = vmatprep.subr.bf16.mxu0 0
        %853 = vmatpush1.bf16.msra.mxu0 0
        %854 = vmatprep.subr.bf16.mxu0 0
        %855 = vmatpush1.bf16.msra.mxu0 0
        %856 = vmatprep.subr.bf16.mxu0 0
        %857 = vmatpush1.bf16.msra.mxu0 0
        %858 = vmatprep.subr.bf16.mxu0 0
        %859 = vmatpush1.bf16.msra.mxu0 0
        %860 = vmatprep.subr.bf16.mxu0 0
        %861 = vmatpush1.bf16.msra.mxu0 0
        %862 = vmatprep.subr.bf16.mxu0 0
        %863 = vmatpush1.bf16.msra.mxu0 0
        %864 = vmatprep.subr.bf16.mxu0 0
        %865 = vmatpush1.bf16.msra.mxu0 0
        %866 = vmatprep.subr.bf16.mxu0 0
        %867 = vmatpush1.bf16.msra.mxu0 0
        %868 = vmatprep.mubr.bf16.mxu0 0
        %869 = vmatmul.mubr.bf16.gmra.mrb[0].mxu0 %v530
        %v870 = vpop.f32.mrb[0].mxu0
        %v871 = vadd.f32 0.0, %v870
        %v872 = vpop.f32.mrb[0].mxu0
        %v873 = vpop.f32.mrb[0].mxu0
        %v874 = vpop.f32.mrb[0].mxu0
        %875 = vdwg.mxu0
        %v876 = vmul.f32 %v871, %v431
        %877 = vadd.xlane.f32.xlu0 %v876
        %v878 = vpop.xlane.xlu0 %877
        %v879 = vrot.slane %v878, 4
        %v880 = vadd.f32 %v878, %v879
        %v881 = vrot.slane %v880, 2
        %v882 = vadd.f32 %v880, %v881
        %v883 = vrot.slane %v882, 1
        %v884 = vadd.f32 %v882, %v883
        %s885 = vtos %v884
        %s886 = sadd.f32 %s736, %s885
        %v887 = vld [vmem:[%s342 + $0x3] sm:$0x1]
        %v888 = vlaneseq
        %v889 = vshrl.u32 %v888, 7
        %v890 = vsub.s32 0, %v889
        %v891 = vrot.slane %v887, %v890
        %vm892 = vcmp.eq.s32.totalorder %v411, %v891
        %vm893 = vcmp.eq.s32.totalorder %v412, %v891
        %vm894 = vcmp.eq.s32.totalorder %v413, %v891
        %vm895 = vcmp.eq.s32.totalorder %v414, %v891
        %vm896 = vcmp.eq.s32.totalorder %v415, %v891
        %vm897 = vcmp.eq.s32.totalorder %v416, %v891
        %vm898 = vcmp.eq.s32.totalorder %v417, %v891
        %vm899 = vcmp.eq.s32.totalorder %v418, %v891
        %vm900 = vcmp.eq.s32.totalorder %v419, %v891
        %vm901 = vcmp.eq.s32.totalorder %v420, %v891
        %vm902 = vcmp.eq.s32.totalorder %v421, %v891
        %vm903 = vcmp.eq.s32.totalorder %v422, %v891
        %vm904 = vcmp.eq.s32.totalorder %v423, %v891
        %vm905 = vcmp.eq.s32.totalorder %v424, %v891
        %vm906 = vcmp.eq.s32.totalorder %v425, %v891
        %vm907 = vcmp.eq.s32.totalorder %v426, %v891
        %v908 = vsel %vm892, 1.0, 0.0
        %v909 = vsel %vm893, 1.0, 0.0
        %v910 = vsel %vm894, 1.0, 0.0
        %v911 = vsel %vm895, 1.0, 0.0
        %v912 = vsel %vm896, 1.0, 0.0
        %v913 = vsel %vm897, 1.0, 0.0
        %v914 = vsel %vm898, 1.0, 0.0
        %v915 = vsel %vm899, 1.0, 0.0
        %v916 = vsel %vm900, 1.0, 0.0
        %v917 = vsel %vm901, 1.0, 0.0
        %v918 = vsel %vm902, 1.0, 0.0
        %v919 = vsel %vm903, 1.0, 0.0
        %v920 = vsel %vm904, 1.0, 0.0
        %v921 = vsel %vm905, 1.0, 0.0
        %v922 = vsel %vm906, 1.0, 0.0
        %v923 = vsel %vm907, 1.0, 0.0
        %v924 = vpack.c.bf16 %v909, %v908
        %v925 = vpack.c.bf16 %v911, %v910
        %v926 = vpack.c.bf16 %v913, %v912
        %v927 = vpack.c.bf16 %v915, %v914
        %v928 = vpack.c.bf16 %v917, %v916
        %v929 = vpack.c.bf16 %v919, %v918
        %v930 = vpack.c.bf16 %v921, %v920
        %v931 = vpack.c.bf16 %v923, %v922
        %932 = vmatprep.subr.bf16.mxu0 0
        %933 = vmatpush1.bf16.msra.mxu0 %v924
        %934 = vmatprep.subr.bf16.mxu0 0
        %935 = vmatpush1.bf16.msra.mxu0 %v925
        %936 = vmatprep.subr.bf16.mxu0 0
        %937 = vmatpush1.bf16.msra.mxu0 %v926
        %938 = vmatprep.subr.bf16.mxu0 0
        %939 = vmatpush1.bf16.msra.mxu0 %v927
        %940 = vmatprep.subr.bf16.mxu0 0
        %941 = vmatpush1.bf16.msra.mxu0 %v928
        %942 = vmatprep.subr.bf16.mxu0 0
        %943 = vmatpush1.bf16.msra.mxu0 %v929
        %944 = vmatprep.subr.bf16.mxu0 0
        %945 = vmatpush1.bf16.msra.mxu0 %v930
        %946 = vmatprep.subr.bf16.mxu0 0
        %947 = vmatpush1.bf16.msra.mxu0 %v931
        %948 = vmatprep.subr.bf16.mxu0 0
        %949 = vmatpush1.bf16.msra.mxu0 0
        %950 = vmatprep.subr.bf16.mxu0 0
        %951 = vmatpush1.bf16.msra.mxu0 0
        %952 = vmatprep.subr.bf16.mxu0 0
        %953 = vmatpush1.bf16.msra.mxu0 0
        %954 = vmatprep.subr.bf16.mxu0 0
        %955 = vmatpush1.bf16.msra.mxu0 0
        %956 = vmatprep.subr.bf16.mxu0 0
        %957 = vmatpush1.bf16.msra.mxu0 0
        %958 = vmatprep.subr.bf16.mxu0 0
        %959 = vmatpush1.bf16.msra.mxu0 0
        %960 = vmatprep.subr.bf16.mxu0 0
        %961 = vmatpush1.bf16.msra.mxu0 0
        %962 = vmatprep.subr.bf16.mxu0 0
        %963 = vmatpush1.bf16.msra.mxu0 0
        %964 = vmatprep.mubr.bf16.mxu0 0
        %965 = vmatmul.mubr.bf16.gmra.mrb[0].mxu0 %v408
        %v966 = vpop.f32.mrb[0].mxu0
        %v967 = vadd.f32 0.0, %v966
        %v968 = vpop.f32.mrb[0].mxu0
        %v969 = vpop.f32.mrb[0].mxu0
        %v970 = vpop.f32.mrb[0].mxu0
        %971 = vdwg.mxu0
        %v972 = vld [vmem:[%s351 + $0x3] sm:$0x1]
        %v973 = vsub.f32 %v967, %v407
        %v975 = vlaneseq
        %v976 = vshrl.u32 %v975, 7
        %v977 = vsub.s32 0, %v976
        %v978 = vrot.slane %v972, %v977
        %v980 = vmul.f32 %v978, %v973
        %v981 = vadd.f32 %v407, %v980
        %v982 = vpack.c.bf16 %v981, %v981
        %v984 = vsel %vm532, %v982, 0
        %986 = vmatprep.subr.bf16.mxu0 0
        %987 = vmatpush1.bf16.msra.mxu0 %v984
        %988 = vmatprep.subr.bf16.mxu0 0
        %989 = vmatpush1.bf16.msra.mxu0 0
        %990 = vmatprep.subr.bf16.mxu0 0
        %991 = vmatpush1.bf16.msra.mxu0 0
        %992 = vmatprep.subr.bf16.mxu0 0
        %993 = vmatpush1.bf16.msra.mxu0 0
        %994 = vmatprep.subr.bf16.mxu0 0
        %995 = vmatpush1.bf16.msra.mxu0 0
        %996 = vmatprep.subr.bf16.mxu0 0
        %997 = vmatpush1.bf16.msra.mxu0 0
        %998 = vmatprep.subr.bf16.mxu0 0
        %999 = vmatpush1.bf16.msra.mxu0 0
        %1000 = vmatprep.subr.bf16.mxu0 0
        %1001 = vmatpush1.bf16.msra.mxu0 0
        %1002 = vmatprep.subr.bf16.mxu0 0
        %1003 = vmatpush1.bf16.msra.mxu0 0
        %1004 = vmatprep.subr.bf16.mxu0 0
        %1005 = vmatpush1.bf16.msra.mxu0 0
        %1006 = vmatprep.subr.bf16.mxu0 0
        %1007 = vmatpush1.bf16.msra.mxu0 0
        %1008 = vmatprep.subr.bf16.mxu0 0
        %1009 = vmatpush1.bf16.msra.mxu0 0
        %1010 = vmatprep.subr.bf16.mxu0 0
        %1011 = vmatpush1.bf16.msra.mxu0 0
        %1012 = vmatprep.subr.bf16.mxu0 0
        %1013 = vmatpush1.bf16.msra.mxu0 0
        %1014 = vmatprep.subr.bf16.mxu0 0
        %1015 = vmatpush1.bf16.msra.mxu0 0
        %1016 = vmatprep.subr.bf16.mxu0 0
        %1017 = vmatpush1.bf16.msra.mxu0 0
        %1018 = vmatprep.mubr.bf16.mxu0 0
        %1019 = vmatmul.mubr.bf16.gmra.mrb[0].mxu0 %v530
        %v1020 = vpop.f32.mrb[0].mxu0
        %v1021 = vadd.f32 0.0, %v1020
        %v1022 = vpop.f32.mrb[0].mxu0
        %v1023 = vpop.f32.mrb[0].mxu0
        %v1024 = vpop.f32.mrb[0].mxu0
        %1025 = vdwg.mxu0
        %v1026 = vmul.f32 %v1021, %v431
        %1027 = vadd.xlane.f32.xlu0 %v1026
        %v1028 = vpop.xlane.xlu0 %1027
        %v1029 = vrot.slane %v1028, 4
        %v1030 = vadd.f32 %v1028, %v1029
        %v1031 = vrot.slane %v1030, 2
        %v1032 = vadd.f32 %v1030, %v1031
        %v1033 = vrot.slane %v1032, 1
        %v1034 = vadd.f32 %v1032, %v1033
        %s1035 = vtos %v1034
        %s1036 = sadd.f32 %s886, %s1035
        %s1037 = smul.f32 %s1036, 0.001953125
        %v1038 = vstv %s1037
        %v1039 = vsub.f32 %v571, %v1038
        %v1040 = vmul.f32 %v1039, %v431
        %v1041 = vmul.f32 %v1040, %v1040
        %1042 = vadd.xlane.f32.xlu0 %v1041
        %v1043 = vpop.xlane.xlu0 %1042
        %v1044 = vrot.slane %v1043, 4
        %v1045 = vadd.f32 %v1043, %v1044
        %v1046 = vrot.slane %v1045, 2
        %v1047 = vadd.f32 %v1045, %v1046
        %v1048 = vrot.slane %v1047, 1
        %v1049 = vadd.f32 %v1047, %v1048
        %s1050 = vtos %v1049
        %s1051 = sadd.f32 %s1050, 0.0
        %v1052 = vsub.f32 %v721, %v1038
        %v1053 = vmul.f32 %v1052, %v431
        %v1054 = vmul.f32 %v1053, %v1053
        %1055 = vadd.xlane.f32.xlu0 %v1054
        %v1056 = vpop.xlane.xlu0 %1055
        %v1057 = vrot.slane %v1056, 4
        %v1058 = vadd.f32 %v1056, %v1057
        %v1059 = vrot.slane %v1058, 2
        %v1060 = vadd.f32 %v1058, %v1059
        %v1061 = vrot.slane %v1060, 1
        %v1062 = vadd.f32 %v1060, %v1061
        %s1063 = vtos %v1062
        %s1064 = sadd.f32 %s1051, %s1063
        %v1065 = vsub.f32 %v871, %v1038
        %v1066 = vmul.f32 %v1065, %v431
        %v1067 = vmul.f32 %v1066, %v1066
        %1068 = vadd.xlane.f32.xlu0 %v1067
        %v1069 = vpop.xlane.xlu0 %1068
        %v1070 = vrot.slane %v1069, 4
        %v1071 = vadd.f32 %v1069, %v1070
        %v1072 = vrot.slane %v1071, 2
        %v1073 = vadd.f32 %v1071, %v1072
        %v1074 = vrot.slane %v1073, 1
        %v1075 = vadd.f32 %v1073, %v1074
        %s1076 = vtos %v1075
        %s1077 = sadd.f32 %s1064, %s1076
        %v1078 = vsub.f32 %v1021, %v1038
        %v1079 = vmul.f32 %v1078, %v431
        %v1080 = vmul.f32 %v1079, %v1079
        %1081 = vadd.xlane.f32.xlu0 %v1080
        %v1082 = vpop.xlane.xlu0 %1081
        %v1083 = vrot.slane %v1082, 4
        %v1084 = vadd.f32 %v1082, %v1083
        %v1085 = vrot.slane %v1084, 2
        %v1086 = vadd.f32 %v1084, %v1085
        %v1087 = vrot.slane %v1086, 1
        %v1088 = vadd.f32 %v1086, %v1087
        %s1089 = vtos %v1088
        %s1090 = sadd.f32 %s1077, %s1089
        %s1091 = smul.f32 %s1090, 0.001953125
        %s1092 = sadd.f32 %s1091, 1e-05
        %v1093 = vstv %s1092
        %v1094 = vrsqrt.pop %v1093
        %s1095 = vtos %v1094
        %v1096 = vstv %s1095
        %v1097 = vmul.f32 %v1039, %v1096
        %v1098 = vld [vmem:[#allocation10] sm:$0xf]
        %v1099 = vunpack.c.l.bf16 %v1098
        %v1100 = vmul.f32 %v1097, %v1099
        %v1101 = vld [vmem:[%s5] sm:$0xf]
        %v1102 = vunpack.c.l.bf16 %v1101
        %v1103 = vadd.f32 %v1100, %v1102
        %vm1104 = vcmp.ge.f32.partialorder %v1103, 0.0
        %v1105 = vmul.f32 %v1103, 0.02
        %v1106 = vsel %vm1104, %v1103, %v1105
        %v1107 = vadd.f32 %v1106, 0.0
        %v1108 = vmul.f32 %v1052, %v1096
        %v1109 = vld [vmem:[#allocation10 + $0x4] sm:$0xf]
        %v1110 = vunpack.c.l.bf16 %v1109
        %v1111 = vmul.f32 %v1108, %v1110
        %v1112 = vld [vmem:[%s5 + $0x4] sm:$0xf]
        %v1113 = vunpack.c.l.bf16 %v1112
        %v1114 = vadd.f32 %v1111, %v1113
        %vm1115 = vcmp.ge.f32.partialorder %v1114, 0.0
        %v1116 = vmul.f32 %v1114, 0.02
        %v1117 = vsel %vm1115, %v1114, %v1116
        %v1118 = vadd.f32 %v1107, %v1117
        %v1119 = vmul.f32 %v1065, %v1096
        %v1120 = vld [vmem:[#allocation10 + $0x8] sm:$0xf]
        %v1121 = vunpack.c.l.bf16 %v1120
        %v1122 = vmul.f32 %v1119, %v1121
        %v1123 = vld [vmem:[%s5 + $0x8] sm:$0xf]
        %v1124 = vunpack.c.l.bf16 %v1123
        %v1125 = vadd.f32 %v1122, %v1124
        %vm1126 = vcmp.ge.f32.partialorder %v1125, 0.0
        %v1127 = vmul.f32 %v1125, 0.02
        %v1128 = vsel %vm1126, %v1125, %v1127
        %v1129 = vadd.f32 %v1118, %v1128
        %v1130 = vmul.f32 %v1078, %v1096
        %v1131 = vld [vmem:[#allocation10 + $0xc] sm:$0xf]
        %v1132 = vunpack.c.l.bf16 %v1131
        %v1133 = vmul.f32 %v1130, %v1132
        %v1134 = vld [vmem:[%s5 + $0xc] sm:$0xf]
        %v1135 = vunpack.c.l.bf16 %v1134
        %v1136 = vadd.f32 %v1133, %v1135
        %vm1137 = vcmp.ge.f32.partialorder %v1136, 0.0
        %v1138 = vmul.f32 %v1136, 0.02
        %v1139 = vsel %vm1137, %v1136, %v1138
        %v1140 = vadd.f32 %v1129, %v1139
        %v1141 = vld [vmem:[%s405] sm:$0x1]
        %v1143 = vlaneseq
        %v1144 = vshrl.u32 %v1143, 7
        %v1145 = vsub.s32 0, %v1144
        %v1146 = vrot.slane %v1141, %v1145
        %v1148 = vmul.f32 %v1140, %v1146
        %1149 = vst [vmem:[%s402] sm:$0xff] %v1148
        %s1150 = sand.u32 %s203, 1
        %s1151 = scalar_lea.sflag [#allocation4], %s1150
        %s1152 = sand.u32 %s203, 1
        %s1153 = smul.addr %s1152, 8
        %s1154 = scalar_lea.vmem [#allocation11], %s1153
        // Predicated region
        $region69: #{tpu_custom_call.1} parent=47 // pred_check
          %p1155 = pneg %p213
        $region70: #{tpu_custom_call.1} parent=47 // pred_check_branch
          %1157 = sbr.rel (%p1155) target = $region72
        $region71: #{tpu_custom_call.1} parent=47 // pred_region
          %s1159 = ssub.s32 128, 128
          %1160 = vsyncadd %s1151, %s1159
          %s1161 = smul.addr %s28, 128
          %s1162 = scalar_lea.hbm %s7, %s1161
          %s1164 = sshll.u32 %s1154, 4
          %s1165 = int_to_ptr.vmem [resolvable:$true] %s1164
          %1167 = dma.vmem_to_hbm [thread:$0]  %s1165, 128, %s1162, %s1151
        $region72: #{tpu_custom_call.1} parent=47 // pred_fallthru
          _
      $region48: #{tpu_custom_call.1} parent=5 // pred_fallthru
        _
      %p1168 = scmp.le.s32.totalorder 2, %s23
      // Predicated region
      $region73: #{tpu_custom_call.1} parent=5 // pred_check
        %p1169 = pneg %p1168
      $region74: #{tpu_custom_call.1} parent=5 // pred_check_branch
        %1171 = sbr.rel (%p1169) target = $region76
      $region75: #{tpu_custom_call.1} parent=5 // pred_region
        %s1172 = ssub.s32 %s23, 2
        // Predicated region
        $region77: #{tpu_custom_call.1} parent=75 // pred_check
          %p1173 = pneg %p219
        $region78: #{tpu_custom_call.1} parent=75 // pred_check_branch
          %1175 = sbr.rel (%p1173) target = $region80
        $region79: #{tpu_custom_call.1} parent=75 // pred_region
          %s1176 = sand.u32 %s204, 1
          %s1177 = scalar_lea.sflag [#allocation4], %s1176
          %s1178 = sand.u32 %s204, 1
          %s1179 = smul.addr %s1178, 8
          %s1180 = scalar_lea.vmem [#allocation11], %s1179
          %1181 = dma.done %s1177, 128
        $region80: #{tpu_custom_call.1} parent=75 // pred_fallthru
          _
      $region76: #{tpu_custom_call.1} parent=5 // pred_fallthru
        _
    $region6: #{tpu_custom_call.1} parent=1 // loop_footer
      %s27 = sadd.s32 1, %s23
    $region7: #{tpu_custom_call.1} parent=1 // loop_footer_branch
      %22 = sbr.rel target = $region3
    $region8: #{tpu_custom_call.1} parent=1 // loop_exit
      _
    %1182 = vsyncpa [#allocation3], 1
    %s1183 = scalar_lea.sflag [#allocation3], 1
    %1184 = vsyncpa %s1183, 1
    %1185 = vsyncpa [#allocation6], 1
    %s1186 = scalar_lea.sflag [#allocation6], 1
    %1187 = vsyncpa %s1186, 1
    %1188 = vsyncpa [#allocation9], 1
    %1189 = vsyncpa [#allocation4], 1
    %s1190 = scalar_lea.sflag [#allocation4], 1
    %1191 = vsyncpa %s1190, 1

</llo_original>
